<compile_context>
chip_gen: v7x
topology: tpu7x:2x2x1
jax: 0.10.0
libtpu: 0.0.40
codegen_flags: <defaults>
</compile_context>

<pallas_src>
import numpy as np
import jax
import jax.numpy as jnp
from jax.experimental import pallas as pl
from jax.experimental.pallas import tpu as pltpu

# ---------------------------------------------------------------- config ----
IMG_SIZE = 128                 # small image (ref default 800)
SUB_SAMPLE = 16
FEAT = IMG_SIZE // SUB_SAMPLE  # 8x8 feature map
BATCH = 2
C_IN = 128                     # RPN conv width (512 in ref; reduced for test)
RATIOS = [0.5, 1, 2]
SCALES = [8, 16, 32]
N_ANCHORS = len(RATIOS) * len(SCALES)   # 9
NMS_THRESH = 0.7
N_PRE_NMS = 6000               # eval-mode values (self.training = False)
N_POST_NMS = 300
MIN_BOX_SIZE = 16

HEAD_LANES = 128               # lane-dense padded head output width
REG_COLS = 4 * N_ANCHORS       # 36
CLS0_OFF = REG_COLS            # 36
CLS1_OFF = REG_COLS + N_ANCHORS            # 45
PAD_OFF = REG_COLS + 2 * N_ANCHORS         # 54


# --------------------------------------------------------- Pallas kernel ----
def rpn_fused_kernel(x_ref, wc_ref, bc_ref, wh_ref, bh_ref, out_ref, col_ref):
    # x_ref  : (B, H, W, Cin)  f32  NHWC input (unpadded; halo built here)
    # wc_ref : (9*Cin, Cout)   bf16 3x3 conv weights, tap-major (dh, dw, cin)
    # bc_ref : (1, Cout)       f32
    # wh_ref : (Cout, 128)     bf16 [reg(36) | cls0(9) | cls1(9) | zeros(74)]
    # bh_ref : (1, 128)        f32  same layout
    # out_ref: (B*H*W, 128)    f32  [reg | p0 | p1 | pad] lane-dense slab
    # col_ref: (B, H, W, 9*Cin) f32 VMEM im2col scratch
    B, H, W, Cin = x_ref.shape
    N = B * H * W
    K = col_ref.shape[-1]
    A = N_ANCHORS
    R = REG_COLS

    # ---- im2col with implicit zero padding (3x3 conv, pad=1, stride=1) ----
    # Border taps are left as zeros; interior written with static slices.
    col_ref[...] = jnp.zeros_like(col_ref)
    for t, (dh, dw) in enumerate([(i, j) for i in range(3) for j in range(3)]):
        oh0, oh1 = max(0, 1 - dh), min(H, H + 1 - dh)
        ow0, ow1 = max(0, 1 - dw), min(W, W + 1 - dw)
        ih0, iw0 = oh0 + dh - 1, ow0 + dw - 1
        col_ref[:, oh0:oh1, ow0:ow1, t * Cin:(t + 1) * Cin] = (
            x_ref[:, ih0:ih0 + (oh1 - oh0), iw0:iw0 + (ow1 - ow0), :])

    # (B,H,W,9*Cin) -> (B*H*W, 9*Cin): leading-dim collapse, lane dim preserved
    col = col_ref[...].reshape(N, K).astype(jnp.bfloat16)

    # ---- 3x3 conv as one K=9*Cin MXU matmul + bias + LeakyReLU(0.01) ----
    feat = jnp.dot(col, wc_ref[...], preferred_element_type=jnp.float32)
    feat = feat + bc_ref[...]
    feat = jnp.where(feat > 0, feat, jnp.float32(0.01) * feat)

    # ---- fused reg/cls heads: single matmul to a 128-lane padded slab ----
    hout = jnp.dot(feat.astype(jnp.bfloat16), wh_ref[...],
                   preferred_element_type=jnp.float32) + bh_ref[...]
    reg = hout[:, :R]
    l0 = hout[:, R:R + A]          # class-0 logits (even channels per anchor)
    l1 = hout[:, R + A:R + 2 * A]  # class-1 logits (odd channels per anchor)
    # softmax over the 2 classes of each anchor (== F.softmax(..., dim=2))
    m = jnp.maximum(l0, l1)
    e0 = jnp.exp(l0 - m)
    e1 = jnp.exp(l1 - m)
    inv = pl.reciprocal(e0 + e1, approx=True)
    out_ref[...] = jnp.concatenate(
        [reg, e0 * inv, e1 * inv, hout[:, R + 2 * A:]], axis=1
    ).astype(out_ref.dtype)


# ------------------------------------------------------------- JAX glue -----
@jax.jit
def rpn_forward_net(x_nchw, w_conv, b_conv, w_reg, b_reg, w_cls, b_cls):
    """Conv + heads part of RPN.forward. Input is NCHW (PyTorch convention)."""
    B, C, H, W = x_nchw.shape
    A = N_ANCHORS
    x = jnp.transpose(x_nchw, (0, 2, 3, 1))          # NCHW -> NHWC (one relayout)

    Cout = w_conv.shape[-1]
    # 3x3 HWIO weights -> (9*Cin, Cout), tap-major matches im2col layout
    wc = w_conv.reshape(9 * C, Cout).astype(jnp.bfloat16)
    bc = b_conv.reshape(1, Cout).astype(jnp.float32)

    # heads packed as [reg | cls even cols (class 0) | cls odd cols (class 1) | 0-pad]
    w0, b0 = w_cls[:, 0::2], b_cls[0::2]
    w1, b1 = w_cls[:, 1::2], b_cls[1::2]
    wh = jnp.zeros((Cout, HEAD_LANES), jnp.float32)
    wh = (wh.at[:, :REG_COLS].set(w_reg)
            .at[:, CLS0_OFF:CLS0_OFF + A].set(w0)
            .at[:, CLS1_OFF:CLS1_OFF + A].set(w1)).astype(jnp.bfloat16)
    bh = jnp.zeros((1, HEAD_LANES), jnp.float32)
    bh = (bh.at[:, :REG_COLS].set(b_reg)
            .at[:, CLS0_OFF:CLS0_OFF + A].set(b0)
            .at[:, CLS1_OFF:CLS1_OFF + A].set(b1))

    N = B * H * W
    out = pl.pallas_call(
        rpn_fused_kernel,
        out_shape=jax.ShapeDtypeStruct((N, HEAD_LANES), jnp.float32),
        scratch_shapes=[pltpu.VMEM((B, H, W, 9 * C), jnp.float32)],
    )(x, wc, bc, wh, bh)

    reg = out[:, :REG_COLS]
    p0 = out[:, CLS0_OFF:CLS0_OFF + A]
    p1 = out[:, CLS1_OFF:CLS1_OFF + A]
    # matches .permute(0,2,3,1).view(B, -1, 4) / (B, -1, 2) + softmax(dim=2)
    pred_rpn_reg = reg.reshape(B, H * W * A, 4)
    pred_rpn_cls = jnp.stack([p0, p1], axis=-1).reshape(B, H * W * A, 2)
    return pred_rpn_reg, pred_rpn_cls


# ------------------------------------------------- host-side numpy pieces ---
def generate_anchor(img_size, sub_sample, ratios, anchor_scales):
    feature_size = img_size // sub_sample
    ctr_x = np.arange(sub_sample, (feature_size + 1) * sub_sample, sub_sample)
    ctr_y = np.arange(sub_sample, (feature_size + 1) * sub_sample, sub_sample)
    ctr = np.zeros((feature_size * feature_size, 2))
    index = 0
    for x in ctr_x:
        for y in ctr_y:
            ctr[index, 1] = x - 8
            ctr[index, 0] = y - 8
            index += 1
    anchors = np.zeros((feature_size * feature_size * 9, 4), dtype=np.float32)
    index = 0
    for c in ctr:
        cy, cx = c
        for ratio in ratios:
            for anchor_scale in anchor_scales:
                h = sub_sample * anchor_scale * np.sqrt(ratio)
                w = sub_sample * anchor_scale * np.sqrt(1.0 / ratio)
                anchors[index, 0] = cx - w / 2.0
                anchors[index, 1] = cy - h / 2.0
                anchors[index, 2] = w
                anchors[index, 3] = h
                index += 1
    return anchors


def region_proposal_np(anchors, pred_rpn_reg, pred_rpn_cls, img_size):
    # TODO(synk): NMS (argsort + data-dependent while loop) has no clean Pallas
    # equivalent; reproduced on host in numpy exactly as the reference does
    # (including its use of np.maximum for yy2).
    rois = None
    for b in range(pred_rpn_reg.shape[0]):
        np_pred_reg = np.asarray(pred_rpn_reg[b], dtype=np.float32)
        np_pred_cls = np.asarray(pred_rpn_cls[b], dtype=np.float32)
        obj_prob = np_pred_cls[:, 1]
        roi = np.zeros(np_pred_reg.shape, dtype=np.float32)
        roi[:, 0] = np_pred_reg[:, 0] + anchors[:, 0]
        roi[:, 1] = np_pred_reg[:, 1] + anchors[:, 1]
        roi[:, 2] = np_pred_reg[:, 0] + anchors[:, 0] + np_pred_reg[:, 2] + anchors[:, 2]
        roi[:, 3] = np_pred_reg[:, 1] + anchors[:, 1] + np_pred_reg[:, 3] + anchors[:, 3]
        roi[:, slice(0, 4, 2)] = np.clip(roi[:, slice(0, 4, 2)], 0, img_size - 1)
        roi[:, slice(1, 4, 2)] = np.clip(roi[:, slice(1, 4, 2)], 0, img_size - 1)
        w = np_pred_reg[:, 2] + anchors[:, 2]
        h = np_pred_reg[:, 3] + anchors[:, 3]
        keeping_index = np.where((w >= MIN_BOX_SIZE) & (h >= MIN_BOX_SIZE))[0]
        roi = roi[keeping_index, :]
        obj_prob = obj_prob[keeping_index]
        descend_index = obj_prob.argsort()[::-1]
        pre_nms_index = descend_index[:N_PRE_NMS]
        keep = []
        area = (roi[:, 2] - roi[:, 0] + 1) * (roi[:, 3] - roi[:, 1] + 1)
        while pre_nms_index.size > 0:
            idx = pre_nms_index[0]
            keep.append(idx)
            xx1 = np.maximum(roi[:, 0][idx], roi[:, 0][pre_nms_index[1:]])
            yy1 = np.maximum(roi[:, 1][idx], roi[:, 1][pre_nms_index[1:]])
            xx2 = np.minimum(roi[:, 2][idx], roi[:, 2][pre_nms_index[1:]])
            yy2 = np.maximum(roi[:, 3][idx], roi[:, 3][pre_nms_index[1:]])
            ww = np.maximum(0.0, xx2 - xx1 + 1)
            hh = np.maximum(0.0, yy2 - yy1 + 1)
            overlap = ww * hh / (area[idx] + area[pre_nms_index[1:]] - ww * hh)
            non_suppression = np.where(overlap <= NMS_THRESH)[0]
            pre_nms_index = pre_nms_index[non_suppression + 1]
        keep = keep[:N_POST_NMS]
        roi = roi[keep]
        roi[:, 2] = roi[:, 2] - roi[:, 0] + 1
        roi[:, 3] = roi[:, 3] - roi[:, 1] + 1
        rois = roi
    return rois


# ------------------------------------------------------------------ main ----
if __name__ == "__main__":
    key = jax.random.PRNGKey(0)
    kx, kw1, kb1, kw2, kb2, kw3, kb3 = jax.random.split(key, 7)

    # deterministic synthetic parameters (shapes per RPN._network_init)
    x_nchw = jax.random.normal(kx, (BATCH, C_IN, FEAT, FEAT), jnp.float32)
    w_conv = 0.05 * jax.random.normal(kw1, (3, 3, C_IN, C_IN), jnp.float32)   # HWIO
    b_conv = 0.01 * jax.random.normal(kb1, (C_IN,), jnp.float32)
    w_reg = 0.05 * jax.random.normal(kw2, (C_IN, 4 * N_ANCHORS), jnp.float32)
    b_reg = 0.01 * jax.random.normal(kb2, (4 * N_ANCHORS,), jnp.float32)
    w_cls = 0.05 * jax.random.normal(kw3, (C_IN, 2 * N_ANCHORS), jnp.float32)
    b_cls = 0.01 * jax.random.normal(kb3, (2 * N_ANCHORS,), jnp.float32)

    pred_rpn_reg, pred_rpn_cls = rpn_forward_net(
        x_nchw, w_conv, b_conv, w_reg, b_reg, w_cls, b_cls)
    jax.block_until_ready((pred_rpn_reg, pred_rpn_cls))

    total_anchors = N_ANCHORS * FEAT * FEAT
    assert pred_rpn_reg.shape == (BATCH, total_anchors, 4)
    assert pred_rpn_cls.shape == (BATCH, total_anchors, 2)

    anchors = generate_anchor(IMG_SIZE, SUB_SAMPLE, RATIOS, SCALES)
    rois = region_proposal_np(anchors,
                              np.asarray(pred_rpn_reg),
                              np.asarray(pred_rpn_cls),
                              IMG_SIZE)
    rpn_reg_loss = 0   # self.training = False -> loss branch not taken
    rpn_cls_loss = 0

    assert rois.ndim == 2 and rois.shape[1] == 4
    assert np.isfinite(np.asarray(pred_rpn_cls)).all()
    assert np.isfinite(np.asarray(pred_rpn_reg)).all()
    print("KERNEL_OK")
</pallas_src>

<mosaic_0001>
module attributes {stable_mosaic.version = 11 : i64} {
  func.func @rpn_fused_kernel(%arg0: memref<2x8x8x128xf32, #tpu.memory_space<vmem>>, %arg1: memref<1152x128xbf16, #tpu.memory_space<vmem>>, %arg2: memref<1x128xf32, #tpu.memory_space<vmem>>, %arg3: memref<128x128xbf16, #tpu.memory_space<vmem>>, %arg4: memref<1x128xf32, #tpu.memory_space<vmem>>, %arg5: memref<128x128xf32, #tpu.memory_space<vmem>>, %arg6: memref<2x8x8x1152xf32, #tpu.memory_space<vmem>>) attributes {dimension_semantics = [], scalar_prefetch = 0 : i64, scratch_operands = 1 : i64, tpu.core_type = #tpu.core_type<tc>} {
    %cst = arith.constant 0.000000e+00 : f32
    %0 = vector.broadcast %cst : f32 to vector<2x8x8x1152xf32>
    %c0 = arith.constant 0 : index
    %c0_0 = arith.constant 0 : index
    %c0_1 = arith.constant 0 : index
    %c0_2 = arith.constant 0 : index
    %1 = vector.load %arg6[%c0, %c0_0, %c0_1, %c0_2] : memref<2x8x8x1152xf32, #tpu.memory_space<vmem>>, vector<2x8x8x1152xf32>
    tpu.vector_store %arg6[%c0, %c0_0, %c0_1, %c0_2], %0 {strides = array<i32>} : memref<2x8x8x1152xf32, #tpu.memory_space<vmem>>, vector<2x8x8x1152xf32>,
    %c0_3 = arith.constant 0 : index
    %c0_4 = arith.constant 0 : index
    %c0_5 = arith.constant 0 : index
    %c0_6 = arith.constant 0 : index
    %2 = vector.load %arg0[%c0_3, %c0_4, %c0_5, %c0_6] : memref<2x8x8x128xf32, #tpu.memory_space<vmem>>, vector<2x7x7x128xf32>
    %c0_7 = arith.constant 0 : index
    %c1 = arith.constant 1 : index
    %c1_8 = arith.constant 1 : index
    %c0_9 = arith.constant 0 : index
    %3 = vector.load %arg6[%c0_7, %c1, %c1_8, %c0_9] : memref<2x8x8x1152xf32, #tpu.memory_space<vmem>>, vector<2x7x7x128xf32>
    tpu.vector_store %arg6[%c0_7, %c1, %c1_8, %c0_9], %2 {strides = array<i32>} : memref<2x8x8x1152xf32, #tpu.memory_space<vmem>>, vector<2x7x7x128xf32>,
    %c0_10 = arith.constant 0 : index
    %c0_11 = arith.constant 0 : index
    %c0_12 = arith.constant 0 : index
    %c0_13 = arith.constant 0 : index
    %4 = vector.load %arg0[%c0_10, %c0_11, %c0_12, %c0_13] : memref<2x8x8x128xf32, #tpu.memory_space<vmem>>, vector<2x7x8x128xf32>
    %c0_14 = arith.constant 0 : index
    %c1_15 = arith.constant 1 : index
    %c0_16 = arith.constant 0 : index
    %c128 = arith.constant 128 : index
    %5 = vector.load %arg6[%c0_14, %c1_15, %c0_16, %c128] : memref<2x8x8x1152xf32, #tpu.memory_space<vmem>>, vector<2x7x8x128xf32>
    tpu.vector_store %arg6[%c0_14, %c1_15, %c0_16, %c128], %4 {strides = array<i32>} : memref<2x8x8x1152xf32, #tpu.memory_space<vmem>>, vector<2x7x8x128xf32>,
    %c0_17 = arith.constant 0 : index
    %c0_18 = arith.constant 0 : index
    %c1_19 = arith.constant 1 : index
    %c0_20 = arith.constant 0 : index
    %6 = vector.load %arg0[%c0_17, %c0_18, %c1_19, %c0_20] : memref<2x8x8x128xf32, #tpu.memory_space<vmem>>, vector<2x7x7x128xf32>
    %c0_21 = arith.constant 0 : index
    %c1_22 = arith.constant 1 : index
    %c0_23 = arith.constant 0 : index
    %c256 = arith.constant 256 : index
    %7 = vector.load %arg6[%c0_21, %c1_22, %c0_23, %c256] : memref<2x8x8x1152xf32, #tpu.memory_space<vmem>>, vector<2x7x7x128xf32>
    tpu.vector_store %arg6[%c0_21, %c1_22, %c0_23, %c256], %6 {strides = array<i32>} : memref<2x8x8x1152xf32, #tpu.memory_space<vmem>>, vector<2x7x7x128xf32>,
    %c0_24 = arith.constant 0 : index
    %c0_25 = arith.constant 0 : index
    %c0_26 = arith.constant 0 : index
    %c0_27 = arith.constant 0 : index
    %8 = vector.load %arg0[%c0_24, %c0_25, %c0_26, %c0_27] : memref<2x8x8x128xf32, #tpu.memory_space<vmem>>, vector<2x8x7x128xf32>
    %c0_28 = arith.constant 0 : index
    %c0_29 = arith.constant 0 : index
    %c1_30 = arith.constant 1 : index
    %c384 = arith.constant 384 : index
    %9 = vector.load %arg6[%c0_28, %c0_29, %c1_30, %c384] : memref<2x8x8x1152xf32, #tpu.memory_space<vmem>>, vector<2x8x7x128xf32>
    tpu.vector_store %arg6[%c0_28, %c0_29, %c1_30, %c384], %8 {strides = array<i32>} : memref<2x8x8x1152xf32, #tpu.memory_space<vmem>>, vector<2x8x7x128xf32>,
    %c0_31 = arith.constant 0 : index
    %c0_32 = arith.constant 0 : index
    %c0_33 = arith.constant 0 : index
    %c0_34 = arith.constant 0 : index
    %10 = vector.load %arg0[%c0_31, %c0_32, %c0_33, %c0_34] : memref<2x8x8x128xf32, #tpu.memory_space<vmem>>, vector<2x8x8x128xf32>
    %c0_35 = arith.constant 0 : index
    %c0_36 = arith.constant 0 : index
    %c0_37 = arith.constant 0 : index
    %c512 = arith.constant 512 : index
    %11 = vector.load %arg6[%c0_35, %c0_36, %c0_37, %c512] : memref<2x8x8x1152xf32, #tpu.memory_space<vmem>>, vector<2x8x8x128xf32>
    tpu.vector_store %arg6[%c0_35, %c0_36, %c0_37, %c512], %10 {strides = array<i32>} : memref<2x8x8x1152xf32, #tpu.memory_space<vmem>>, vector<2x8x8x128xf32>,
    %c0_38 = arith.constant 0 : index
    %c0_39 = arith.constant 0 : index
    %c1_40 = arith.constant 1 : index
    %c0_41 = arith.constant 0 : index
    %12 = vector.load %arg0[%c0_38, %c0_39, %c1_40, %c0_41] : memref<2x8x8x128xf32, #tpu.memory_space<vmem>>, vector<2x8x7x128xf32>
    %c0_42 = arith.constant 0 : index
    %c0_43 = arith.constant 0 : index
    %c0_44 = arith.constant 0 : index
    %c640 = arith.constant 640 : index
    %13 = vector.load %arg6[%c0_42, %c0_43, %c0_44, %c640] : memref<2x8x8x1152xf32, #tpu.memory_space<vmem>>, vector<2x8x7x128xf32>
    tpu.vector_store %arg6[%c0_42, %c0_43, %c0_44, %c640], %12 {strides = array<i32>} : memref<2x8x8x1152xf32, #tpu.memory_space<vmem>>, vector<2x8x7x128xf32>,
    %c0_45 = arith.constant 0 : index
    %c1_46 = arith.constant 1 : index
    %c0_47 = arith.constant 0 : index
    %c0_48 = arith.constant 0 : index
    %14 = vector.load %arg0[%c0_45, %c1_46, %c0_47, %c0_48] : memref<2x8x8x128xf32, #tpu.memory_space<vmem>>, vector<2x7x7x128xf32>
    %c0_49 = arith.constant 0 : index
    %c0_50 = arith.constant 0 : index
    %c1_51 = arith.constant 1 : index
    %c768 = arith.constant 768 : index
    %15 = vector.load %arg6[%c0_49, %c0_50, %c1_51, %c768] : memref<2x8x8x1152xf32, #tpu.memory_space<vmem>>, vector<2x7x7x128xf32>
    tpu.vector_store %arg6[%c0_49, %c0_50, %c1_51, %c768], %14 {strides = array<i32>} : memref<2x8x8x1152xf32, #tpu.memory_space<vmem>>, vector<2x7x7x128xf32>,
    %c0_52 = arith.constant 0 : index
    %c1_53 = arith.constant 1 : index
    %c0_54 = arith.constant 0 : index
    %c0_55 = arith.constant 0 : index
    %16 = vector.load %arg0[%c0_52, %c1_53, %c0_54, %c0_55] : memref<2x8x8x128xf32, #tpu.memory_space<vmem>>, vector<2x7x8x128xf32>
    %c0_56 = arith.constant 0 : index
    %c0_57 = arith.constant 0 : index
    %c0_58 = arith.constant 0 : index
    %c896 = arith.constant 896 : index
    %17 = vector.load %arg6[%c0_56, %c0_57, %c0_58, %c896] : memref<2x8x8x1152xf32, #tpu.memory_space<vmem>>, vector<2x7x8x128xf32>
    tpu.vector_store %arg6[%c0_56, %c0_57, %c0_58, %c896], %16 {strides = array<i32>} : memref<2x8x8x1152xf32, #tpu.memory_space<vmem>>, vector<2x7x8x128xf32>,
    %c0_59 = arith.constant 0 : index
    %c1_60 = arith.constant 1 : index
    %c1_61 = arith.constant 1 : index
    %c0_62 = arith.constant 0 : index
    %18 = vector.load %arg0[%c0_59, %c1_60, %c1_61, %c0_62] : memref<2x8x8x128xf32, #tpu.memory_space<vmem>>, vector<2x7x7x128xf32>
    %c0_63 = arith.constant 0 : index
    %c0_64 = arith.constant 0 : index
    %c0_65 = arith.constant 0 : index
    %c1024 = arith.constant 1024 : index
    %19 = vector.load %arg6[%c0_63, %c0_64, %c0_65, %c1024] : memref<2x8x8x1152xf32, #tpu.memory_space<vmem>>, vector<2x7x7x128xf32>
    tpu.vector_store %arg6[%c0_63, %c0_64, %c0_65, %c1024], %18 {strides = array<i32>} : memref<2x8x8x1152xf32, #tpu.memory_space<vmem>>, vector<2x7x7x128xf32>,
    %c0_66 = arith.constant 0 : index
    %c0_67 = arith.constant 0 : index
    %c0_68 = arith.constant 0 : index
    %c0_69 = arith.constant 0 : index
    %20 = vector.load %arg6[%c0_66, %c0_67, %c0_68, %c0_69] : memref<2x8x8x1152xf32, #tpu.memory_space<vmem>>, vector<2x8x8x1152xf32>
    %21 = vector.shape_cast %20 : vector<2x8x8x1152xf32> to vector<128x1152xf32>
    %22 = arith.truncf %21 : vector<128x1152xf32> to vector<128x1152xbf16>
    %c0_70 = arith.constant 0 : index
    %c0_71 = arith.constant 0 : index
    %23 = vector.load %arg1[%c0_70, %c0_71] : memref<1152x128xbf16, #tpu.memory_space<vmem>>, vector<1152x128xbf16>
    %cst_72 = arith.constant dense<0.000000e+00> : vector<128x128xf32>
    %24 = tpu.matmul %22, %23, %cst_72 {dimension_numbers = #tpu.dot_dimension_numbers<[1], [0], [0], [1], [0, 0, 1, 1], [], []>} : vector<128x1152xbf16>, vector<1152x128xbf16>, vector<128x128xf32> -> vector<128x128xf32>
    %c0_73 = arith.constant 0 : index
    %c0_74 = arith.constant 0 : index
    %25 = vector.load %arg2[%c0_73, %c0_74] : memref<1x128xf32, #tpu.memory_space<vmem>>, vector<1x128xf32>
    %26 = vector.broadcast %25 : vector<1x128xf32> to vector<128x128xf32>
    %27 = arith.addf %24, %26 : vector<128x128xf32>
    %cst_75 = arith.constant 0.000000e+00 : f32
    %28 = vector.broadcast %cst_75 : f32 to vector<128x128xf32>
    %29 = arith.cmpf ogt, %27, %28 : vector<128x128xf32>
    %cst_76 = arith.constant 0.00999999977 : f32
    %30 = vector.broadcast %cst_76 : f32 to vector<128x128xf32>
    %31 = arith.mulf %30, %27 : vector<128x128xf32>
    %32 = arith.select %29, %27, %31 : vector<128x128xi1>, vector<128x128xf32>
    %33 = arith.truncf %32 : vector<128x128xf32> to vector<128x128xbf16>
    %c0_77 = arith.constant 0 : index
    %c0_78 = arith.constant 0 : index
    %34 = vector.load %arg3[%c0_77, %c0_78] : memref<128x128xbf16, #tpu.memory_space<vmem>>, vector<128x128xbf16>
    %cst_79 = arith.constant dense<0.000000e+00> : vector<128x128xf32>
    %35 = tpu.matmul %33, %34, %cst_79 {dimension_numbers = #tpu.dot_dimension_numbers<[1], [0], [0], [1], [0, 0, 1, 1], [], []>} : vector<128x128xbf16>, vector<128x128xbf16>, vector<128x128xf32> -> vector<128x128xf32>
    %c0_80 = arith.constant 0 : index
    %c0_81 = arith.constant 0 : index
    %36 = vector.load %arg4[%c0_80, %c0_81] : memref<1x128xf32, #tpu.memory_space<vmem>>, vector<1x128xf32>
    %37 = vector.broadcast %36 : vector<1x128xf32> to vector<128x128xf32>
    %38 = arith.addf %35, %37 : vector<128x128xf32>
    %39 = vector.extract_strided_slice %38 {offsets = [0, 0], sizes = [128, 36], strides = [1, 1]} : vector<128x128xf32> to vector<128x36xf32>
    %40 = vector.extract_strided_slice %38 {offsets = [0, 36], sizes = [128, 9], strides = [1, 1]} : vector<128x128xf32> to vector<128x9xf32>
    %41 = vector.extract_strided_slice %38 {offsets = [0, 45], sizes = [128, 9], strides = [1, 1]} : vector<128x128xf32> to vector<128x9xf32>
    %42 = arith.maximumf %40, %41 : vector<128x9xf32>
    %43 = arith.subf %40, %42 : vector<128x9xf32>
    %44 = math.exp %43 : vector<128x9xf32>
    %45 = arith.subf %41, %42 : vector<128x9xf32>
    %46 = math.exp %45 : vector<128x9xf32>
    %47 = arith.addf %44, %46 : vector<128x9xf32>
    %48 = tpu.reciprocal %47 {approx = true} : vector<128x9xf32> -> vector<128x9xf32>
    %49 = arith.mulf %44, %48 : vector<128x9xf32>
    %50 = arith.mulf %46, %48 : vector<128x9xf32>
    %51 = vector.extract_strided_slice %38 {offsets = [0, 54], sizes = [128, 74], strides = [1, 1]} : vector<128x128xf32> to vector<128x74xf32>
    %52 = tpu.concatenate %39, %49, %50, %51 in 1 : vector<128x36xf32>, vector<128x9xf32>, vector<128x9xf32>, vector<128x74xf32> -> vector<128x128xf32>
    %c0_82 = arith.constant 0 : index
    %c0_83 = arith.constant 0 : index
    %53 = vector.load %arg5[%c0_82, %c0_83] : memref<128x128xf32, #tpu.memory_space<vmem>>, vector<128x128xf32>
    tpu.vector_store %arg5[%c0_82, %c0_83], %52 {strides = array<i32>} : memref<128x128xf32, #tpu.memory_space<vmem>>, vector<128x128xf32>,
    return
  }
}

</mosaic_0001>

<llo_original>
// kernel: rpn_forward_net.1
$region0: #{rpn_forward_net.1}
  #allocation0 [shape = 'u32[]', space=smem, size = 0x4, offset = 0x4, fixed_abs, tag = 'smem constant byte address 0x4 - core index']
  #allocation1 [shape = 'u32[144,128]{1,0:T(1,128)}', space=vmem, size = 0x12000, scoped, tag = 'internal scratch']
  #allocation2 [shape = 'f32[2,8,8,1152]{3,2,1,0:T(8,128)}', space=vmem, size = 0x90000, scoped, tag = 'scratch operand']
  %s0 = inlined_call_operand.vmem [shape: f32[2,8,8,128], index: 0, kind: input, shape index: {}]
  %s1 = inlined_call_operand.vmem [shape: bf16[1152,128], index: 1, kind: input, shape index: {}]
  %s2 = inlined_call_operand.vmem [shape: f32[1,128], index: 2, kind: input, shape index: {}]
  %s3 = inlined_call_operand.vmem [shape: bf16[128,128], index: 3, kind: input, shape index: {}]
  %s4 = inlined_call_operand.vmem [shape: f32[1,128], index: 4, kind: input, shape index: {}]
  %s5 = inlined_call_operand.vmem [shape: f32[128,128], index: 5, kind: output, shape index: {}]
  %s6 = sld [smem:[#allocation0]]
  $region30: #{rpn_forward_net.1} parent=0
    _
  %s8 = ssub.s32 1, %s6
  %s9 = scalar_select 0, %s8, %s6
  // Predicated region
  $region2: #{rpn_forward_net.1} parent=0 // pred_check
    _
  $region3: #{rpn_forward_net.1} parent=0 // pred_check_branch
    %11 = sbr.rel (0) target = $region5
  $region4: #{rpn_forward_net.1} parent=0 // pred_region
    _
  $region5: #{rpn_forward_net.1} parent=0 // pred_fallthru
    _
  // Predicated region
  $region6: #{rpn_forward_net.1} parent=0 // pred_check
    _
  $region7: #{rpn_forward_net.1} parent=0 // pred_check_branch
    %13 = sbr.rel (0) target = $region9
  $region8: #{rpn_forward_net.1} parent=0 // pred_region
    _
  $region9: #{rpn_forward_net.1} parent=0 // pred_fallthru
    _
  // Predicated region
  $region10: #{rpn_forward_net.1} parent=0 // pred_check
    _
  $region11: #{rpn_forward_net.1} parent=0 // pred_check_branch
    %15 = sbr.rel (0) target = $region13
  $region12: #{rpn_forward_net.1} parent=0 // pred_region
    _
  $region13: #{rpn_forward_net.1} parent=0 // pred_fallthru
    _
  // Predicated region
  $region14: #{rpn_forward_net.1} parent=0 // pred_check
    _
  $region15: #{rpn_forward_net.1} parent=0 // pred_check_branch
    %17 = sbr.rel (0) target = $region17
  $region16: #{rpn_forward_net.1} parent=0 // pred_region
    _
  $region17: #{rpn_forward_net.1} parent=0 // pred_fallthru
    _
  // Predicated region
  $region18: #{rpn_forward_net.1} parent=0 // pred_check
    _
  $region19: #{rpn_forward_net.1} parent=0 // pred_check_branch
    %19 = sbr.rel (0) target = $region21
  $region20: #{rpn_forward_net.1} parent=0 // pred_region
    _
  $region21: #{rpn_forward_net.1} parent=0 // pred_fallthru
    _
  %21 = vst [vmem:[#allocation2] sm:$0xff] 0.0
  %22 = vst [vmem:[#allocation2 + $0x8] sm:$0xff] 0.0
  %23 = vst [vmem:[#allocation2 + $0x10] sm:$0xff] 0.0
  %24 = vst [vmem:[#allocation2 + $0x18] sm:$0xff] 0.0
  %25 = vst [vmem:[#allocation2 + $0x20] sm:$0xff] 0.0
  %26 = vst [vmem:[#allocation2 + $0x28] sm:$0xff] 0.0
  %27 = vst [vmem:[#allocation2 + $0x30] sm:$0xff] 0.0
  %28 = vst [vmem:[#allocation2 + $0x38] sm:$0xff] 0.0
  %29 = vst [vmem:[#allocation2 + $0x40] sm:$0xff] 0.0
  %30 = vst [vmem:[#allocation2 + $0x48] sm:$0xff] 0.0
  %31 = vst [vmem:[#allocation2 + $0x50] sm:$0xff] 0.0
  %32 = vst [vmem:[#allocation2 + $0x58] sm:$0xff] 0.0
  %33 = vst [vmem:[#allocation2 + $0x60] sm:$0xff] 0.0
  %34 = vst [vmem:[#allocation2 + $0x68] sm:$0xff] 0.0
  %35 = vst [vmem:[#allocation2 + $0x70] sm:$0xff] 0.0
  %36 = vst [vmem:[#allocation2 + $0x78] sm:$0xff] 0.0
  %37 = vst [vmem:[#allocation2 + $0x80] sm:$0xff] 0.0
  %38 = vst [vmem:[#allocation2 + $0x88] sm:$0xff] 0.0
  %39 = vst [vmem:[#allocation2 + $0x90] sm:$0xff] 0.0
  %40 = vst [vmem:[#allocation2 + $0x98] sm:$0xff] 0.0
  %41 = vst [vmem:[#allocation2 + $0xa0] sm:$0xff] 0.0
  %42 = vst [vmem:[#allocation2 + $0xa8] sm:$0xff] 0.0
  %43 = vst [vmem:[#allocation2 + $0xb0] sm:$0xff] 0.0
  %44 = vst [vmem:[#allocation2 + $0xb8] sm:$0xff] 0.0
  %45 = vst [vmem:[#allocation2 + $0xc0] sm:$0xff] 0.0
  %46 = vst [vmem:[#allocation2 + $0xc8] sm:$0xff] 0.0
  %47 = vst [vmem:[#allocation2 + $0xd0] sm:$0xff] 0.0
  %48 = vst [vmem:[#allocation2 + $0xd8] sm:$0xff] 0.0
  %49 = vst [vmem:[#allocation2 + $0xe0] sm:$0xff] 0.0
  %50 = vst [vmem:[#allocation2 + $0xe8] sm:$0xff] 0.0
  %51 = vst [vmem:[#allocation2 + $0xf0] sm:$0xff] 0.0
  %52 = vst [vmem:[#allocation2 + $0xf8] sm:$0xff] 0.0
  %53 = vst [vmem:[#allocation2 + $0x100] sm:$0xff] 0.0
  %54 = vst [vmem:[#allocation2 + $0x108] sm:$0xff] 0.0
  %55 = vst [vmem:[#allocation2 + $0x110] sm:$0xff] 0.0
  %56 = vst [vmem:[#allocation2 + $0x118] sm:$0xff] 0.0
  %57 = vst [vmem:[#allocation2 + $0x120] sm:$0xff] 0.0
  %58 = vst [vmem:[#allocation2 + $0x128] sm:$0xff] 0.0
  %59 = vst [vmem:[#allocation2 + $0x130] sm:$0xff] 0.0
  %60 = vst [vmem:[#allocation2 + $0x138] sm:$0xff] 0.0
  %61 = vst [vmem:[#allocation2 + $0x140] sm:$0xff] 0.0
  %62 = vst [vmem:[#allocation2 + $0x148] sm:$0xff] 0.0
  %63 = vst [vmem:[#allocation2 + $0x150] sm:$0xff] 0.0
  %64 = vst [vmem:[#allocation2 + $0x158] sm:$0xff] 0.0
  %65 = vst [vmem:[#allocation2 + $0x160] sm:$0xff] 0.0
  %66 = vst [vmem:[#allocation2 + $0x168] sm:$0xff] 0.0
  %67 = vst [vmem:[#allocation2 + $0x170] sm:$0xff] 0.0
  %68 = vst [vmem:[#allocation2 + $0x178] sm:$0xff] 0.0
  %69 = vst [vmem:[#allocation2 + $0x180] sm:$0xff] 0.0
  %70 = vst [vmem:[#allocation2 + $0x188] sm:$0xff] 0.0
  %71 = vst [vmem:[#allocation2 + $0x190] sm:$0xff] 0.0
  %72 = vst [vmem:[#allocation2 + $0x198] sm:$0xff] 0.0
  %73 = vst [vmem:[#allocation2 + $0x1a0] sm:$0xff] 0.0
  %74 = vst [vmem:[#allocation2 + $0x1a8] sm:$0xff] 0.0
  %75 = vst [vmem:[#allocation2 + $0x1b0] sm:$0xff] 0.0
  %76 = vst [vmem:[#allocation2 + $0x1b8] sm:$0xff] 0.0
  %77 = vst [vmem:[#allocation2 + $0x1c0] sm:$0xff] 0.0
  %78 = vst [vmem:[#allocation2 + $0x1c8] sm:$0xff] 0.0
  %79 = vst [vmem:[#allocation2 + $0x1d0] sm:$0xff] 0.0
  %80 = vst [vmem:[#allocation2 + $0x1d8] sm:$0xff] 0.0
  %81 = vst [vmem:[#allocation2 + $0x1e0] sm:$0xff] 0.0
  %82 = vst [vmem:[#allocation2 + $0x1e8] sm:$0xff] 0.0
  %83 = vst [vmem:[#allocation2 + $0x1f0] sm:$0xff] 0.0
  %84 = vst [vmem:[#allocation2 + $0x1f8] sm:$0xff] 0.0
  %85 = vst [vmem:[#allocation2 + $0x200] sm:$0xff] 0.0
  %86 = vst [vmem:[#allocation2 + $0x208] sm:$0xff] 0.0
  %87 = vst [vmem:[#allocation2 + $0x210] sm:$0xff] 0.0
  %88 = vst [vmem:[#allocation2 + $0x218] sm:$0xff] 0.0
  %89 = vst [vmem:[#allocation2 + $0x220] sm:$0xff] 0.0
  %90 = vst [vmem:[#allocation2 + $0x228] sm:$0xff] 0.0
  %91 = vst [vmem:[#allocation2 + $0x230] sm:$0xff] 0.0
  %92 = vst [vmem:[#allocation2 + $0x238] sm:$0xff] 0.0
  %93 = vst [vmem:[#allocation2 + $0x240] sm:$0xff] 0.0
  %94 = vst [vmem:[#allocation2 + $0x248] sm:$0xff] 0.0
  %95 = vst [vmem:[#allocation2 + $0x250] sm:$0xff] 0.0
  %96 = vst [vmem:[#allocation2 + $0x258] sm:$0xff] 0.0
  %97 = vst [vmem:[#allocation2 + $0x260] sm:$0xff] 0.0
  %98 = vst [vmem:[#allocation2 + $0x268] sm:$0xff] 0.0
  %99 = vst [vmem:[#allocation2 + $0x270] sm:$0xff] 0.0
  %100 = vst [vmem:[#allocation2 + $0x278] sm:$0xff] 0.0
  %101 = vst [vmem:[#allocation2 + $0x280] sm:$0xff] 0.0
  %102 = vst [vmem:[#allocation2 + $0x288] sm:$0xff] 0.0
  %103 = vst [vmem:[#allocation2 + $0x290] sm:$0xff] 0.0
  %104 = vst [vmem:[#allocation2 + $0x298] sm:$0xff] 0.0
  %105 = vst [vmem:[#allocation2 + $0x2a0] sm:$0xff] 0.0
  %106 = vst [vmem:[#allocation2 + $0x2a8] sm:$0xff] 0.0
  %107 = vst [vmem:[#allocation2 + $0x2b0] sm:$0xff] 0.0
  %108 = vst [vmem:[#allocation2 + $0x2b8] sm:$0xff] 0.0
  %109 = vst [vmem:[#allocation2 + $0x2c0] sm:$0xff] 0.0
  %110 = vst [vmem:[#allocation2 + $0x2c8] sm:$0xff] 0.0
  %111 = vst [vmem:[#allocation2 + $0x2d0] sm:$0xff] 0.0
  %112 = vst [vmem:[#allocation2 + $0x2d8] sm:$0xff] 0.0
  %113 = vst [vmem:[#allocation2 + $0x2e0] sm:$0xff] 0.0
  %114 = vst [vmem:[#allocation2 + $0x2e8] sm:$0xff] 0.0
  %115 = vst [vmem:[#allocation2 + $0x2f0] sm:$0xff] 0.0
  %116 = vst [vmem:[#allocation2 + $0x2f8] sm:$0xff] 0.0
  %117 = vst [vmem:[#allocation2 + $0x300] sm:$0xff] 0.0
  %118 = vst [vmem:[#allocation2 + $0x308] sm:$0xff] 0.0
  %119 = vst [vmem:[#allocation2 + $0x310] sm:$0xff] 0.0
  %120 = vst [vmem:[#allocation2 + $0x318] sm:$0xff] 0.0
  %121 = vst [vmem:[#allocation2 + $0x320] sm:$0xff] 0.0
  %122 = vst [vmem:[#allocation2 + $0x328] sm:$0xff] 0.0
  %123 = vst [vmem:[#allocation2 + $0x330] sm:$0xff] 0.0
  %124 = vst [vmem:[#allocation2 + $0x338] sm:$0xff] 0.0
  %125 = vst [vmem:[#allocation2 + $0x340] sm:$0xff] 0.0
  %126 = vst [vmem:[#allocation2 + $0x348] sm:$0xff] 0.0
  %127 = vst [vmem:[#allocation2 + $0x350] sm:$0xff] 0.0
  %128 = vst [vmem:[#allocation2 + $0x358] sm:$0xff] 0.0
  %129 = vst [vmem:[#allocation2 + $0x360] sm:$0xff] 0.0
  %130 = vst [vmem:[#allocation2 + $0x368] sm:$0xff] 0.0
  %131 = vst [vmem:[#allocation2 + $0x370] sm:$0xff] 0.0
  %132 = vst [vmem:[#allocation2 + $0x378] sm:$0xff] 0.0
  %133 = vst [vmem:[#allocation2 + $0x380] sm:$0xff] 0.0
  %134 = vst [vmem:[#allocation2 + $0x388] sm:$0xff] 0.0
  %135 = vst [vmem:[#allocation2 + $0x390] sm:$0xff] 0.0
  %136 = vst [vmem:[#allocation2 + $0x398] sm:$0xff] 0.0
  %137 = vst [vmem:[#allocation2 + $0x3a0] sm:$0xff] 0.0
  %138 = vst [vmem:[#allocation2 + $0x3a8] sm:$0xff] 0.0
  %139 = vst [vmem:[#allocation2 + $0x3b0] sm:$0xff] 0.0
  %140 = vst [vmem:[#allocation2 + $0x3b8] sm:$0xff] 0.0
  %141 = vst [vmem:[#allocation2 + $0x3c0] sm:$0xff] 0.0
  %142 = vst [vmem:[#allocation2 + $0x3c8] sm:$0xff] 0.0
  %143 = vst [vmem:[#allocation2 + $0x3d0] sm:$0xff] 0.0
  %144 = vst [vmem:[#allocation2 + $0x3d8] sm:$0xff] 0.0
  %145 = vst [vmem:[#allocation2 + $0x3e0] sm:$0xff] 0.0
  %146 = vst [vmem:[#allocation2 + $0x3e8] sm:$0xff] 0.0
  %147 = vst [vmem:[#allocation2 + $0x3f0] sm:$0xff] 0.0
  %148 = vst [vmem:[#allocation2 + $0x3f8] sm:$0xff] 0.0
  %149 = vst [vmem:[#allocation2 + $0x400] sm:$0xff] 0.0
  %150 = vst [vmem:[#allocation2 + $0x408] sm:$0xff] 0.0
  %151 = vst [vmem:[#allocation2 + $0x410] sm:$0xff] 0.0
  %152 = vst [vmem:[#allocation2 + $0x418] sm:$0xff] 0.0
  %153 = vst [vmem:[#allocation2 + $0x420] sm:$0xff] 0.0
  %154 = vst [vmem:[#allocation2 + $0x428] sm:$0xff] 0.0
  %155 = vst [vmem:[#allocation2 + $0x430] sm:$0xff] 0.0
  %156 = vst [vmem:[#allocation2 + $0x438] sm:$0xff] 0.0
  %157 = vst [vmem:[#allocation2 + $0x440] sm:$0xff] 0.0
  %158 = vst [vmem:[#allocation2 + $0x448] sm:$0xff] 0.0
  %159 = vst [vmem:[#allocation2 + $0x450] sm:$0xff] 0.0
  %160 = vst [vmem:[#allocation2 + $0x458] sm:$0xff] 0.0
  %161 = vst [vmem:[#allocation2 + $0x460] sm:$0xff] 0.0
  %162 = vst [vmem:[#allocation2 + $0x468] sm:$0xff] 0.0
  %163 = vst [vmem:[#allocation2 + $0x470] sm:$0xff] 0.0
  %164 = vst [vmem:[#allocation2 + $0x478] sm:$0xff] 0.0
  %v165 = vld [vmem:[%s0] sm:$0x7f]
  %v166 = vld [vmem:[%s0 + $0x8] sm:$0x7f]
  %v167 = vld [vmem:[%s0 + $0x10] sm:$0x7f]
  %v168 = vld [vmem:[%s0 + $0x18] sm:$0x7f]
  %v169 = vld [vmem:[%s0 + $0x20] sm:$0x7f]
  %v170 = vld [vmem:[%s0 + $0x28] sm:$0x7f]
  %v171 = vld [vmem:[%s0 + $0x30] sm:$0x7f]
  %v172 = vld [vmem:[%s0 + $0x40] sm:$0x7f]
  %v173 = vld [vmem:[%s0 + $0x48] sm:$0x7f]
  %v174 = vld [vmem:[%s0 + $0x50] sm:$0x7f]
  %v175 = vld [vmem:[%s0 + $0x58] sm:$0x7f]
  %v176 = vld [vmem:[%s0 + $0x60] sm:$0x7f]
  %v177 = vld [vmem:[%s0 + $0x68] sm:$0x7f]
  %v178 = vld [vmem:[%s0 + $0x70] sm:$0x7f]
  %v193 = vrot.slane %v165, 7
  %v194 = vrot.slane %v166, 7
  %v195 = vrot.slane %v167, 7
  %v196 = vrot.slane %v168, 7
  %v197 = vrot.slane %v169, 7
  %v198 = vrot.slane %v170, 7
  %v199 = vrot.slane %v171, 7
  %v200 = vrot.slane %v172, 7
  %v201 = vrot.slane %v173, 7
  %v202 = vrot.slane %v174, 7
  %v203 = vrot.slane %v175, 7
  %v204 = vrot.slane %v176, 7
  %v205 = vrot.slane %v177, 7
  %v206 = vrot.slane %v178, 7
  %s221 = scalar_lea.vmem [#allocation2], 72
  %222 = vst [vmem:[%s221] sm:$0xfe] %v193
  %223 = vst [vmem:[%s221 + $0x48] sm:$0xfe] %v194
  %224 = vst [vmem:[%s221 + $0x90] sm:$0xfe] %v195
  %225 = vst [vmem:[%s221 + $0xd8] sm:$0xfe] %v196
  %226 = vst [vmem:[%s221 + $0x120] sm:$0xfe] %v197
  %227 = vst [vmem:[%s221 + $0x168] sm:$0xfe] %v198
  %228 = vst [vmem:[%s221 + $0x1b0] sm:$0xfe] %v199
  %229 = vst [vmem:[%s221 + $0x240] sm:$0xfe] %v200
  %230 = vst [vmem:[%s221 + $0x288] sm:$0xfe] %v201
  %231 = vst [vmem:[%s221 + $0x2d0] sm:$0xfe] %v202
  %232 = vst [vmem:[%s221 + $0x318] sm:$0xfe] %v203
  %233 = vst [vmem:[%s221 + $0x360] sm:$0xfe] %v204
  %234 = vst [vmem:[%s221 + $0x3a8] sm:$0xfe] %v205
  %235 = vst [vmem:[%s221 + $0x3f0] sm:$0xfe] %v206
  %v236 = vld [vmem:[%s0] sm:$0xff]
  %v237 = vld [vmem:[%s0 + $0x8] sm:$0xff]
  %v238 = vld [vmem:[%s0 + $0x10] sm:$0xff]
  %v239 = vld [vmem:[%s0 + $0x18] sm:$0xff]
  %v240 = vld [vmem:[%s0 + $0x20] sm:$0xff]
  %v241 = vld [vmem:[%s0 + $0x28] sm:$0xff]
  %v242 = vld [vmem:[%s0 + $0x30] sm:$0xff]
  %v243 = vld [vmem:[%s0 + $0x40] sm:$0xff]
  %v244 = vld [vmem:[%s0 + $0x48] sm:$0xff]
  %v245 = vld [vmem:[%s0 + $0x50] sm:$0xff]
  %v246 = vld [vmem:[%s0 + $0x58] sm:$0xff]
  %v247 = vld [vmem:[%s0 + $0x60] sm:$0xff]
  %v248 = vld [vmem:[%s0 + $0x68] sm:$0xff]
  %v249 = vld [vmem:[%s0 + $0x70] sm:$0xff]
  %250 = vst [vmem:[%s221 + $0x8] sm:$0xff] %v236
  %251 = vst [vmem:[%s221 + $0x50] sm:$0xff] %v237
  %252 = vst [vmem:[%s221 + $0x98] sm:$0xff] %v238
  %253 = vst [vmem:[%s221 + $0xe0] sm:$0xff] %v239
  %254 = vst [vmem:[%s221 + $0x128] sm:$0xff] %v240
  %255 = vst [vmem:[%s221 + $0x170] sm:$0xff] %v241
  %256 = vst [vmem:[%s221 + $0x1b8] sm:$0xff] %v242
  %257 = vst [vmem:[%s221 + $0x248] sm:$0xff] %v243
  %258 = vst [vmem:[%s221 + $0x290] sm:$0xff] %v244
  %259 = vst [vmem:[%s221 + $0x2d8] sm:$0xff] %v245
  %260 = vst [vmem:[%s221 + $0x320] sm:$0xff] %v246
  %261 = vst [vmem:[%s221 + $0x368] sm:$0xff] %v247
  %262 = vst [vmem:[%s221 + $0x3b0] sm:$0xff] %v248
  %263 = vst [vmem:[%s221 + $0x3f8] sm:$0xff] %v249
  %v264 = vld [vmem:[%s0 + $0x1] sm:$0x7f]
  %v265 = vld [vmem:[%s0 + $0x9] sm:$0x7f]
  %v266 = vld [vmem:[%s0 + $0x11] sm:$0x7f]
  %v267 = vld [vmem:[%s0 + $0x19] sm:$0x7f]
  %v268 = vld [vmem:[%s0 + $0x21] sm:$0x7f]
  %v269 = vld [vmem:[%s0 + $0x29] sm:$0x7f]
  %v270 = vld [vmem:[%s0 + $0x31] sm:$0x7f]
  %v271 = vld [vmem:[%s0 + $0x41] sm:$0x7f]
  %v272 = vld [vmem:[%s0 + $0x49] sm:$0x7f]
  %v273 = vld [vmem:[%s0 + $0x51] sm:$0x7f]
  %v274 = vld [vmem:[%s0 + $0x59] sm:$0x7f]
  %v275 = vld [vmem:[%s0 + $0x61] sm:$0x7f]
  %v276 = vld [vmem:[%s0 + $0x69] sm:$0x7f]
  %v277 = vld [vmem:[%s0 + $0x71] sm:$0x7f]
  %278 = vst [vmem:[%s221 + $0x10] sm:$0x7f] %v264
  %279 = vst [vmem:[%s221 + $0x58] sm:$0x7f] %v265
  %280 = vst [vmem:[%s221 + $0xa0] sm:$0x7f] %v266
  %281 = vst [vmem:[%s221 + $0xe8] sm:$0x7f] %v267
  %282 = vst [vmem:[%s221 + $0x130] sm:$0x7f] %v268
  %283 = vst [vmem:[%s221 + $0x178] sm:$0x7f] %v269
  %284 = vst [vmem:[%s221 + $0x1c0] sm:$0x7f] %v270
  %285 = vst [vmem:[%s221 + $0x250] sm:$0x7f] %v271
  %286 = vst [vmem:[%s221 + $0x298] sm:$0x7f] %v272
  %287 = vst [vmem:[%s221 + $0x2e0] sm:$0x7f] %v273
  %288 = vst [vmem:[%s221 + $0x328] sm:$0x7f] %v274
  %289 = vst [vmem:[%s221 + $0x370] sm:$0x7f] %v275
  %290 = vst [vmem:[%s221 + $0x3b8] sm:$0x7f] %v276
  %291 = vst [vmem:[%s221 + $0x400] sm:$0x7f] %v277
  %v292 = vld [vmem:[%s0] sm:$0x7f]
  %v293 = vld [vmem:[%s0 + $0x8] sm:$0x7f]
  %v294 = vld [vmem:[%s0 + $0x10] sm:$0x7f]
  %v295 = vld [vmem:[%s0 + $0x18] sm:$0x7f]
  %v296 = vld [vmem:[%s0 + $0x20] sm:$0x7f]
  %v297 = vld [vmem:[%s0 + $0x28] sm:$0x7f]
  %v298 = vld [vmem:[%s0 + $0x30] sm:$0x7f]
  %v299 = vld [vmem:[%s0 + $0x38] sm:$0x7f]
  %v300 = vld [vmem:[%s0 + $0x40] sm:$0x7f]
  %v301 = vld [vmem:[%s0 + $0x48] sm:$0x7f]
  %v302 = vld [vmem:[%s0 + $0x50] sm:$0x7f]
  %v303 = vld [vmem:[%s0 + $0x58] sm:$0x7f]
  %v304 = vld [vmem:[%s0 + $0x60] sm:$0x7f]
  %v305 = vld [vmem:[%s0 + $0x68] sm:$0x7f]
  %v306 = vld [vmem:[%s0 + $0x70] sm:$0x7f]
  %v307 = vld [vmem:[%s0 + $0x78] sm:$0x7f]
  %v324 = vrot.slane %v292, 7
  %v325 = vrot.slane %v293, 7
  %v326 = vrot.slane %v294, 7
  %v327 = vrot.slane %v295, 7
  %v328 = vrot.slane %v296, 7
  %v329 = vrot.slane %v297, 7
  %v330 = vrot.slane %v298, 7
  %v331 = vrot.slane %v299, 7
  %v332 = vrot.slane %v300, 7
  %v333 = vrot.slane %v301, 7
  %v334 = vrot.slane %v302, 7
  %v335 = vrot.slane %v303, 7
  %v336 = vrot.slane %v304, 7
  %v337 = vrot.slane %v305, 7
  %v338 = vrot.slane %v306, 7
  %v339 = vrot.slane %v307, 7
  %356 = vst [vmem:[#allocation2 + $0x18] sm:$0xfe] %v324
  %357 = vst [vmem:[#allocation2 + $0x60] sm:$0xfe] %v325
  %358 = vst [vmem:[#allocation2 + $0xa8] sm:$0xfe] %v326
  %359 = vst [vmem:[#allocation2 + $0xf0] sm:$0xfe] %v327
  %360 = vst [vmem:[#allocation2 + $0x138] sm:$0xfe] %v328
  %361 = vst [vmem:[#allocation2 + $0x180] sm:$0xfe] %v329
  %362 = vst [vmem:[#allocation2 + $0x1c8] sm:$0xfe] %v330
  %363 = vst [vmem:[#allocation2 + $0x210] sm:$0xfe] %v331
  %364 = vst [vmem:[#allocation2 + $0x258] sm:$0xfe] %v332
  %365 = vst [vmem:[#allocation2 + $0x2a0] sm:$0xfe] %v333
  %366 = vst [vmem:[#allocation2 + $0x2e8] sm:$0xfe] %v334
  %367 = vst [vmem:[#allocation2 + $0x330] sm:$0xfe] %v335
  %368 = vst [vmem:[#allocation2 + $0x378] sm:$0xfe] %v336
  %369 = vst [vmem:[#allocation2 + $0x3c0] sm:$0xfe] %v337
  %370 = vst [vmem:[#allocation2 + $0x408] sm:$0xfe] %v338
  %371 = vst [vmem:[#allocation2 + $0x450] sm:$0xfe] %v339
  %v372 = vld [vmem:[%s0] sm:$0xff]
  %v373 = vld [vmem:[%s0 + $0x8] sm:$0xff]
  %v374 = vld [vmem:[%s0 + $0x10] sm:$0xff]
  %v375 = vld [vmem:[%s0 + $0x18] sm:$0xff]
  %v376 = vld [vmem:[%s0 + $0x20] sm:$0xff]
  %v377 = vld [vmem:[%s0 + $0x28] sm:$0xff]
  %v378 = vld [vmem:[%s0 + $0x30] sm:$0xff]
  %v379 = vld [vmem:[%s0 + $0x38] sm:$0xff]
  %v380 = vld [vmem:[%s0 + $0x40] sm:$0xff]
  %v381 = vld [vmem:[%s0 + $0x48] sm:$0xff]
  %v382 = vld [vmem:[%s0 + $0x50] sm:$0xff]
  %v383 = vld [vmem:[%s0 + $0x58] sm:$0xff]
  %v384 = vld [vmem:[%s0 + $0x60] sm:$0xff]
  %v385 = vld [vmem:[%s0 + $0x68] sm:$0xff]
  %v386 = vld [vmem:[%s0 + $0x70] sm:$0xff]
  %v387 = vld [vmem:[%s0 + $0x78] sm:$0xff]
  %388 = vst [vmem:[#allocation2 + $0x20] sm:$0xff] %v372
  %389 = vst [vmem:[#allocation2 + $0x68] sm:$0xff] %v373
  %390 = vst [vmem:[#allocation2 + $0xb0] sm:$0xff] %v374
  %391 = vst [vmem:[#allocation2 + $0xf8] sm:$0xff] %v375
  %392 = vst [vmem:[#allocation2 + $0x140] sm:$0xff] %v376
  %393 = vst [vmem:[#allocation2 + $0x188] sm:$0xff] %v377
  %394 = vst [vmem:[#allocation2 + $0x1d0] sm:$0xff] %v378
  %395 = vst [vmem:[#allocation2 + $0x218] sm:$0xff] %v379
  %396 = vst [vmem:[#allocation2 + $0x260] sm:$0xff] %v380
  %397 = vst [vmem:[#allocation2 + $0x2a8] sm:$0xff] %v381
  %398 = vst [vmem:[#allocation2 + $0x2f0] sm:$0xff] %v382
  %399 = vst [vmem:[#allocation2 + $0x338] sm:$0xff] %v383
  %400 = vst [vmem:[#allocation2 + $0x380] sm:$0xff] %v384
  %401 = vst [vmem:[#allocation2 + $0x3c8] sm:$0xff] %v385
  %402 = vst [vmem:[#allocation2 + $0x410] sm:$0xff] %v386
  %403 = vst [vmem:[#allocation2 + $0x458] sm:$0xff] %v387
  %v404 = vld [vmem:[%s0 + $0x1] sm:$0x7f]
  %v405 = vld [vmem:[%s0 + $0x9] sm:$0x7f]
  %v406 = vld [vmem:[%s0 + $0x11] sm:$0x7f]
  %v407 = vld [vmem:[%s0 + $0x19] sm:$0x7f]
  %v408 = vld [vmem:[%s0 + $0x21] sm:$0x7f]
  %v409 = vld [vmem:[%s0 + $0x29] sm:$0x7f]
  %v410 = vld [vmem:[%s0 + $0x31] sm:$0x7f]
  %v411 = vld [vmem:[%s0 + $0x39] sm:$0x7f]
  %v412 = vld [vmem:[%s0 + $0x41] sm:$0x7f]
  %v413 = vld [vmem:[%s0 + $0x49] sm:$0x7f]
  %v414 = vld [vmem:[%s0 + $0x51] sm:$0x7f]
  %v415 = vld [vmem:[%s0 + $0x59] sm:$0x7f]
  %v416 = vld [vmem:[%s0 + $0x61] sm:$0x7f]
  %v417 = vld [vmem:[%s0 + $0x69] sm:$0x7f]
  %v418 = vld [vmem:[%s0 + $0x71] sm:$0x7f]
  %v419 = vld [vmem:[%s0 + $0x79] sm:$0x7f]
  %420 = vst [vmem:[#allocation2 + $0x28] sm:$0x7f] %v404
  %421 = vst [vmem:[#allocation2 + $0x70] sm:$0x7f] %v405
  %422 = vst [vmem:[#allocation2 + $0xb8] sm:$0x7f] %v406
  %423 = vst [vmem:[#allocation2 + $0x100] sm:$0x7f] %v407
  %424 = vst [vmem:[#allocation2 + $0x148] sm:$0x7f] %v408
  %425 = vst [vmem:[#allocation2 + $0x190] sm:$0x7f] %v409
  %426 = vst [vmem:[#allocation2 + $0x1d8] sm:$0x7f] %v410
  %427 = vst [vmem:[#allocation2 + $0x220] sm:$0x7f] %v411
  %428 = vst [vmem:[#allocation2 + $0x268] sm:$0x7f] %v412
  %429 = vst [vmem:[#allocation2 + $0x2b0] sm:$0x7f] %v413
  %430 = vst [vmem:[#allocation2 + $0x2f8] sm:$0x7f] %v414
  %431 = vst [vmem:[#allocation2 + $0x340] sm:$0x7f] %v415
  %432 = vst [vmem:[#allocation2 + $0x388] sm:$0x7f] %v416
  %433 = vst [vmem:[#allocation2 + $0x3d0] sm:$0x7f] %v417
  %434 = vst [vmem:[#allocation2 + $0x418] sm:$0x7f] %v418
  %435 = vst [vmem:[#allocation2 + $0x460] sm:$0x7f] %v419
  %s436 = scalar_lea.vmem %s0, 8
  %v437 = vld [vmem:[%s436] sm:$0x7f]
  %v438 = vld [vmem:[%s436 + $0x8] sm:$0x7f]
  %v439 = vld [vmem:[%s436 + $0x10] sm:$0x7f]
  %v440 = vld [vmem:[%s436 + $0x18] sm:$0x7f]
  %v441 = vld [vmem:[%s436 + $0x20] sm:$0x7f]
  %v442 = vld [vmem:[%s436 + $0x28] sm:$0x7f]
  %v443 = vld [vmem:[%s436 + $0x30] sm:$0x7f]
  %v444 = vld [vmem:[%s436 + $0x40] sm:$0x7f]
  %v445 = vld [vmem:[%s436 + $0x48] sm:$0x7f]
  %v446 = vld [vmem:[%s436 + $0x50] sm:$0x7f]
  %v447 = vld [vmem:[%s436 + $0x58] sm:$0x7f]
  %v448 = vld [vmem:[%s436 + $0x60] sm:$0x7f]
  %v449 = vld [vmem:[%s436 + $0x68] sm:$0x7f]
  %v450 = vld [vmem:[%s436 + $0x70] sm:$0x7f]
  %v465 = vrot.slane %v437, 7
  %v466 = vrot.slane %v438, 7
  %v467 = vrot.slane %v439, 7
  %v468 = vrot.slane %v440, 7
  %v469 = vrot.slane %v441, 7
  %v470 = vrot.slane %v442, 7
  %v471 = vrot.slane %v443, 7
  %v472 = vrot.slane %v444, 7
  %v473 = vrot.slane %v445, 7
  %v474 = vrot.slane %v446, 7
  %v475 = vrot.slane %v447, 7
  %v476 = vrot.slane %v448, 7
  %v477 = vrot.slane %v449, 7
  %v478 = vrot.slane %v450, 7
  %493 = vst [vmem:[#allocation2 + $0x30] sm:$0xfe] %v465
  %494 = vst [vmem:[#allocation2 + $0x78] sm:$0xfe] %v466
  %495 = vst [vmem:[#allocation2 + $0xc0] sm:$0xfe] %v467
  %496 = vst [vmem:[#allocation2 + $0x108] sm:$0xfe] %v468
  %497 = vst [vmem:[#allocation2 + $0x150] sm:$0xfe] %v469
  %498 = vst [vmem:[#allocation2 + $0x198] sm:$0xfe] %v470
  %499 = vst [vmem:[#allocation2 + $0x1e0] sm:$0xfe] %v471
  %500 = vst [vmem:[#allocation2 + $0x270] sm:$0xfe] %v472
  %501 = vst [vmem:[#allocation2 + $0x2b8] sm:$0xfe] %v473
  %502 = vst [vmem:[#allocation2 + $0x300] sm:$0xfe] %v474
  %503 = vst [vmem:[#allocation2 + $0x348] sm:$0xfe] %v475
  %504 = vst [vmem:[#allocation2 + $0x390] sm:$0xfe] %v476
  %505 = vst [vmem:[#allocation2 + $0x3d8] sm:$0xfe] %v477
  %506 = vst [vmem:[#allocation2 + $0x420] sm:$0xfe] %v478
  %v507 = vld [vmem:[%s436] sm:$0xff]
  %v508 = vld [vmem:[%s436 + $0x8] sm:$0xff]
  %v509 = vld [vmem:[%s436 + $0x10] sm:$0xff]
  %v510 = vld [vmem:[%s436 + $0x18] sm:$0xff]
  %v511 = vld [vmem:[%s436 + $0x20] sm:$0xff]
  %v512 = vld [vmem:[%s436 + $0x28] sm:$0xff]
  %v513 = vld [vmem:[%s436 + $0x30] sm:$0xff]
  %v514 = vld [vmem:[%s436 + $0x40] sm:$0xff]
  %v515 = vld [vmem:[%s436 + $0x48] sm:$0xff]
  %v516 = vld [vmem:[%s436 + $0x50] sm:$0xff]
  %v517 = vld [vmem:[%s436 + $0x58] sm:$0xff]
  %v518 = vld [vmem:[%s436 + $0x60] sm:$0xff]
  %v519 = vld [vmem:[%s436 + $0x68] sm:$0xff]
  %v520 = vld [vmem:[%s436 + $0x70] sm:$0xff]
  %521 = vst [vmem:[#allocation2 + $0x38] sm:$0xff] %v507
  %522 = vst [vmem:[#allocation2 + $0x80] sm:$0xff] %v508
  %523 = vst [vmem:[#allocation2 + $0xc8] sm:$0xff] %v509
  %524 = vst [vmem:[#allocation2 + $0x110] sm:$0xff] %v510
  %525 = vst [vmem:[#allocation2 + $0x158] sm:$0xff] %v511
  %526 = vst [vmem:[#allocation2 + $0x1a0] sm:$0xff] %v512
  %527 = vst [vmem:[#allocation2 + $0x1e8] sm:$0xff] %v513
  %528 = vst [vmem:[#allocation2 + $0x278] sm:$0xff] %v514
  %529 = vst [vmem:[#allocation2 + $0x2c0] sm:$0xff] %v515
  %530 = vst [vmem:[#allocation2 + $0x308] sm:$0xff] %v516
  %531 = vst [vmem:[#allocation2 + $0x350] sm:$0xff] %v517
  %532 = vst [vmem:[#allocation2 + $0x398] sm:$0xff] %v518
  %533 = vst [vmem:[#allocation2 + $0x3e0] sm:$0xff] %v519
  %534 = vst [vmem:[#allocation2 + $0x428] sm:$0xff] %v520
  %v535 = vld [vmem:[%s436 + $0x1] sm:$0x7f]
  %v536 = vld [vmem:[%s436 + $0x9] sm:$0x7f]
  %v537 = vld [vmem:[%s436 + $0x11] sm:$0x7f]
  %v538 = vld [vmem:[%s436 + $0x19] sm:$0x7f]
  %v539 = vld [vmem:[%s436 + $0x21] sm:$0x7f]
  %v540 = vld [vmem:[%s436 + $0x29] sm:$0x7f]
  %v541 = vld [vmem:[%s436 + $0x31] sm:$0x7f]
  %v542 = vld [vmem:[%s436 + $0x41] sm:$0x7f]
  %v543 = vld [vmem:[%s436 + $0x49] sm:$0x7f]
  %v544 = vld [vmem:[%s436 + $0x51] sm:$0x7f]
  %v545 = vld [vmem:[%s436 + $0x59] sm:$0x7f]
  %v546 = vld [vmem:[%s436 + $0x61] sm:$0x7f]
  %v547 = vld [vmem:[%s436 + $0x69] sm:$0x7f]
  %v548 = vld [vmem:[%s436 + $0x71] sm:$0x7f]
  %549 = vst [vmem:[#allocation2 + $0x40] sm:$0x7f] %v535
  %550 = vst [vmem:[#allocation2 + $0x88] sm:$0x7f] %v536
  %551 = vst [vmem:[#allocation2 + $0xd0] sm:$0x7f] %v537
  %552 = vst [vmem:[#allocation2 + $0x118] sm:$0x7f] %v538
  %553 = vst [vmem:[#allocation2 + $0x160] sm:$0x7f] %v539
  %554 = vst [vmem:[#allocation2 + $0x1a8] sm:$0x7f] %v540
  %555 = vst [vmem:[#allocation2 + $0x1f0] sm:$0x7f] %v541
  %556 = vst [vmem:[#allocation2 + $0x280] sm:$0x7f] %v542
  %557 = vst [vmem:[#allocation2 + $0x2c8] sm:$0x7f] %v543
  %558 = vst [vmem:[#allocation2 + $0x310] sm:$0x7f] %v544
  %559 = vst [vmem:[#allocation2 + $0x358] sm:$0x7f] %v545
  %560 = vst [vmem:[#allocation2 + $0x3a0] sm:$0x7f] %v546
  %561 = vst [vmem:[#allocation2 + $0x3e8] sm:$0x7f] %v547
  %562 = vst [vmem:[#allocation2 + $0x430] sm:$0x7f] %v548
  %v563 = vld [vmem:[#allocation2] sm:$0xff]
  %v564 = vld [vmem:[#allocation2 + $0x8] sm:$0xff]
  %v565 = vld [vmem:[#allocation2 + $0x10] sm:$0xff]
  %v566 = vld [vmem:[#allocation2 + $0x18] sm:$0xff]
  %v567 = vld [vmem:[#allocation2 + $0x20] sm:$0xff]
  %v568 = vld [vmem:[#allocation2 + $0x28] sm:$0xff]
  %v569 = vld [vmem:[#allocation2 + $0x30] sm:$0xff]
  %v570 = vld [vmem:[#allocation2 + $0x38] sm:$0xff]
  %v571 = vld [vmem:[#allocation2 + $0x40] sm:$0xff]
  %v572 = vld [vmem:[#allocation2 + $0x48] sm:$0xff]
  %v573 = vld [vmem:[#allocation2 + $0x50] sm:$0xff]
  %v574 = vld [vmem:[#allocation2 + $0x58] sm:$0xff]
  %v575 = vld [vmem:[#allocation2 + $0x60] sm:$0xff]
  %v576 = vld [vmem:[#allocation2 + $0x68] sm:$0xff]
  %v577 = vld [vmem:[#allocation2 + $0x70] sm:$0xff]
  %v578 = vld [vmem:[#allocation2 + $0x78] sm:$0xff]
  %v579 = vld [vmem:[#allocation2 + $0x80] sm:$0xff]
  %v580 = vld [vmem:[#allocation2 + $0x88] sm:$0xff]
  %v581 = vld [vmem:[#allocation2 + $0x90] sm:$0xff]
  %v582 = vld [vmem:[#allocation2 + $0x98] sm:$0xff]
  %v583 = vld [vmem:[#allocation2 + $0xa0] sm:$0xff]
  %v584 = vld [vmem:[#allocation2 + $0xa8] sm:$0xff]
  %v585 = vld [vmem:[#allocation2 + $0xb0] sm:$0xff]
  %v586 = vld [vmem:[#allocation2 + $0xb8] sm:$0xff]
  %v587 = vld [vmem:[#allocation2 + $0xc0] sm:$0xff]
  %v588 = vld [vmem:[#allocation2 + $0xc8] sm:$0xff]
  %v589 = vld [vmem:[#allocation2 + $0xd0] sm:$0xff]
  %v590 = vld [vmem:[#allocation2 + $0xd8] sm:$0xff]
  %v591 = vld [vmem:[#allocation2 + $0xe0] sm:$0xff]
  %v592 = vld [vmem:[#allocation2 + $0xe8] sm:$0xff]
  %v593 = vld [vmem:[#allocation2 + $0xf0] sm:$0xff]
  %v594 = vld [vmem:[#allocation2 + $0xf8] sm:$0xff]
  %v595 = vld [vmem:[#allocation2 + $0x100] sm:$0xff]
  %v596 = vld [vmem:[#allocation2 + $0x108] sm:$0xff]
  %v597 = vld [vmem:[#allocation2 + $0x110] sm:$0xff]
  %v598 = vld [vmem:[#allocation2 + $0x118] sm:$0xff]
  %v599 = vld [vmem:[#allocation2 + $0x120] sm:$0xff]
  %v600 = vld [vmem:[#allocation2 + $0x128] sm:$0xff]
  %v601 = vld [vmem:[#allocation2 + $0x130] sm:$0xff]
  %v602 = vld [vmem:[#allocation2 + $0x138] sm:$0xff]
  %v603 = vld [vmem:[#allocation2 + $0x140] sm:$0xff]
  %v604 = vld [vmem:[#allocation2 + $0x148] sm:$0xff]
  %v605 = vld [vmem:[#allocation2 + $0x150] sm:$0xff]
  %v606 = vld [vmem:[#allocation2 + $0x158] sm:$0xff]
  %v607 = vld [vmem:[#allocation2 + $0x160] sm:$0xff]
  %v608 = vld [vmem:[#allocation2 + $0x168] sm:$0xff]
  %v609 = vld [vmem:[#allocation2 + $0x170] sm:$0xff]
  %v610 = vld [vmem:[#allocation2 + $0x178] sm:$0xff]
  %v611 = vld [vmem:[#allocation2 + $0x180] sm:$0xff]
  %v612 = vld [vmem:[#allocation2 + $0x188] sm:$0xff]
  %v613 = vld [vmem:[#allocation2 + $0x190] sm:$0xff]
  %v614 = vld [vmem:[#allocation2 + $0x198] sm:$0xff]
  %v615 = vld [vmem:[#allocation2 + $0x1a0] sm:$0xff]
  %v616 = vld [vmem:[#allocation2 + $0x1a8] sm:$0xff]
  %v617 = vld [vmem:[#allocation2 + $0x1b0] sm:$0xff]
  %v618 = vld [vmem:[#allocation2 + $0x1b8] sm:$0xff]
  %v619 = vld [vmem:[#allocation2 + $0x1c0] sm:$0xff]
  %v620 = vld [vmem:[#allocation2 + $0x1c8] sm:$0xff]
  %v621 = vld [vmem:[#allocation2 + $0x1d0] sm:$0xff]
  %v622 = vld [vmem:[#allocation2 + $0x1d8] sm:$0xff]
  %v623 = vld [vmem:[#allocation2 + $0x1e0] sm:$0xff]
  %v624 = vld [vmem:[#allocation2 + $0x1e8] sm:$0xff]
  %v625 = vld [vmem:[#allocation2 + $0x1f0] sm:$0xff]
  %v626 = vld [vmem:[#allocation2 + $0x1f8] sm:$0xff]
  %v627 = vld [vmem:[#allocation2 + $0x200] sm:$0xff]
  %v628 = vld [vmem:[#allocation2 + $0x208] sm:$0xff]
  %v629 = vld [vmem:[#allocation2 + $0x210] sm:$0xff]
  %v630 = vld [vmem:[#allocation2 + $0x218] sm:$0xff]
  %v631 = vld [vmem:[#allocation2 + $0x220] sm:$0xff]
  %v632 = vld [vmem:[#allocation2 + $0x228] sm:$0xff]
  %v633 = vld [vmem:[#allocation2 + $0x230] sm:$0xff]
  %v634 = vld [vmem:[#allocation2 + $0x238] sm:$0xff]
  %v635 = vld [vmem:[#allocation2 + $0x240] sm:$0xff]
  %v636 = vld [vmem:[#allocation2 + $0x248] sm:$0xff]
  %v637 = vld [vmem:[#allocation2 + $0x250] sm:$0xff]
  %v638 = vld [vmem:[#allocation2 + $0x258] sm:$0xff]
  %v639 = vld [vmem:[#allocation2 + $0x260] sm:$0xff]
  %v640 = vld [vmem:[#allocation2 + $0x268] sm:$0xff]
  %v641 = vld [vmem:[#allocation2 + $0x270] sm:$0xff]
  %v642 = vld [vmem:[#allocation2 + $0x278] sm:$0xff]
  %v643 = vld [vmem:[#allocation2 + $0x280] sm:$0xff]
  %v644 = vld [vmem:[#allocation2 + $0x288] sm:$0xff]
  %v645 = vld [vmem:[#allocation2 + $0x290] sm:$0xff]
  %v646 = vld [vmem:[#allocation2 + $0x298] sm:$0xff]
  %v647 = vld [vmem:[#allocation2 + $0x2a0] sm:$0xff]
  %v648 = vld [vmem:[#allocation2 + $0x2a8] sm:$0xff]
  %v649 = vld [vmem:[#allocation2 + $0x2b0] sm:$0xff]
  %v650 = vld [vmem:[#allocation2 + $0x2b8] sm:$0xff]
  %v651 = vld [vmem:[#allocation2 + $0x2c0] sm:$0xff]
  %v652 = vld [vmem:[#allocation2 + $0x2c8] sm:$0xff]
  %v653 = vld [vmem:[#allocation2 + $0x2d0] sm:$0xff]
  %v654 = vld [vmem:[#allocation2 + $0x2d8] sm:$0xff]
  %v655 = vld [vmem:[#allocation2 + $0x2e0] sm:$0xff]
  %v656 = vld [vmem:[#allocation2 + $0x2e8] sm:$0xff]
  %v657 = vld [vmem:[#allocation2 + $0x2f0] sm:$0xff]
  %v658 = vld [vmem:[#allocation2 + $0x2f8] sm:$0xff]
  %v659 = vld [vmem:[#allocation2 + $0x300] sm:$0xff]
  %v660 = vld [vmem:[#allocation2 + $0x308] sm:$0xff]
  %v661 = vld [vmem:[#allocation2 + $0x310] sm:$0xff]
  %v662 = vld [vmem:[#allocation2 + $0x318] sm:$0xff]
  %v663 = vld [vmem:[#allocation2 + $0x320] sm:$0xff]
  %v664 = vld [vmem:[#allocation2 + $0x328] sm:$0xff]
  %v665 = vld [vmem:[#allocation2 + $0x330] sm:$0xff]
  %v666 = vld [vmem:[#allocation2 + $0x338] sm:$0xff]
  %v667 = vld [vmem:[#allocation2 + $0x340] sm:$0xff]
  %v668 = vld [vmem:[#allocation2 + $0x348] sm:$0xff]
  %v669 = vld [vmem:[#allocation2 + $0x350] sm:$0xff]
  %v670 = vld [vmem:[#allocation2 + $0x358] sm:$0xff]
  %v671 = vld [vmem:[#allocation2 + $0x360] sm:$0xff]
  %v672 = vld [vmem:[#allocation2 + $0x368] sm:$0xff]
  %v673 = vld [vmem:[#allocation2 + $0x370] sm:$0xff]
  %v674 = vld [vmem:[#allocation2 + $0x378] sm:$0xff]
  %v675 = vld [vmem:[#allocation2 + $0x380] sm:$0xff]
  %v676 = vld [vmem:[#allocation2 + $0x388] sm:$0xff]
  %v677 = vld [vmem:[#allocation2 + $0x390] sm:$0xff]
  %v678 = vld [vmem:[#allocation2 + $0x398] sm:$0xff]
  %v679 = vld [vmem:[#allocation2 + $0x3a0] sm:$0xff]
  %v680 = vld [vmem:[#allocation2 + $0x3a8] sm:$0xff]
  %v681 = vld [vmem:[#allocation2 + $0x3b0] sm:$0xff]
  %v682 = vld [vmem:[#allocation2 + $0x3b8] sm:$0xff]
  %v683 = vld [vmem:[#allocation2 + $0x3c0] sm:$0xff]
  %v684 = vld [vmem:[#allocation2 + $0x3c8] sm:$0xff]
  %v685 = vld [vmem:[#allocation2 + $0x3d0] sm:$0xff]
  %v686 = vld [vmem:[#allocation2 + $0x3d8] sm:$0xff]
  %v687 = vld [vmem:[#allocation2 + $0x3e0] sm:$0xff]
  %v688 = vld [vmem:[#allocation2 + $0x3e8] sm:$0xff]
  %v689 = vld [vmem:[#allocation2 + $0x3f0] sm:$0xff]
  %v690 = vld [vmem:[#allocation2 + $0x3f8] sm:$0xff]
  %v691 = vld [vmem:[#allocation2 + $0x400] sm:$0xff]
  %v692 = vld [vmem:[#allocation2 + $0x408] sm:$0xff]
  %v693 = vld [vmem:[#allocation2 + $0x410] sm:$0xff]
  %v694 = vld [vmem:[#allocation2 + $0x418] sm:$0xff]
  %v695 = vld [vmem:[#allocation2 + $0x420] sm:$0xff]
  %v696 = vld [vmem:[#allocation2 + $0x428] sm:$0xff]
  %v697 = vld [vmem:[#allocation2 + $0x430] sm:$0xff]
  %v698 = vld [vmem:[#allocation2 + $0x438] sm:$0xff]
  %v699 = vld [vmem:[#allocation2 + $0x440] sm:$0xff]
  %v700 = vld [vmem:[#allocation2 + $0x448] sm:$0xff]
  %v701 = vld [vmem:[#allocation2 + $0x450] sm:$0xff]
  %v702 = vld [vmem:[#allocation2 + $0x458] sm:$0xff]
  %v703 = vld [vmem:[#allocation2 + $0x460] sm:$0xff]
  %v704 = vld [vmem:[#allocation2 + $0x468] sm:$0xff]
  %v705 = vld [vmem:[#allocation2 + $0x470] sm:$0xff]
  %v706 = vld [vmem:[#allocation2 + $0x478] sm:$0xff]
  %v707 = vpack.c.bf16 %v572, %v563
  %v708 = vpack.c.bf16 %v573, %v564
  %v709 = vpack.c.bf16 %v574, %v565
  %v710 = vpack.c.bf16 %v575, %v566
  %v711 = vpack.c.bf16 %v576, %v567
  %v712 = vpack.c.bf16 %v577, %v568
  %v713 = vpack.c.bf16 %v578, %v569
  %v714 = vpack.c.bf16 %v579, %v570
  %v715 = vpack.c.bf16 %v580, %v571
  %v716 = vpack.c.bf16 %v590, %v581
  %v717 = vpack.c.bf16 %v591, %v582
  %v718 = vpack.c.bf16 %v592, %v583
  %v719 = vpack.c.bf16 %v593, %v584
  %v720 = vpack.c.bf16 %v594, %v585
  %v721 = vpack.c.bf16 %v595, %v586
  %v722 = vpack.c.bf16 %v596, %v587
  %v723 = vpack.c.bf16 %v597, %v588
  %v724 = vpack.c.bf16 %v598, %v589
  %v725 = vpack.c.bf16 %v608, %v599
  %v726 = vpack.c.bf16 %v609, %v600
  %v727 = vpack.c.bf16 %v610, %v601
  %v728 = vpack.c.bf16 %v611, %v602
  %v729 = vpack.c.bf16 %v612, %v603
  %v730 = vpack.c.bf16 %v613, %v604
  %v731 = vpack.c.bf16 %v614, %v605
  %v732 = vpack.c.bf16 %v615, %v606
  %v733 = vpack.c.bf16 %v616, %v607
  %v734 = vpack.c.bf16 %v626, %v617
  %v735 = vpack.c.bf16 %v627, %v618
  %v736 = vpack.c.bf16 %v628, %v619
  %v737 = vpack.c.bf16 %v629, %v620
  %v738 = vpack.c.bf16 %v630, %v621
  %v739 = vpack.c.bf16 %v631, %v622
  %v740 = vpack.c.bf16 %v632, %v623
  %v741 = vpack.c.bf16 %v633, %v624
  %v742 = vpack.c.bf16 %v634, %v625
  %v743 = vpack.c.bf16 %v644, %v635
  %v744 = vpack.c.bf16 %v645, %v636
  %v745 = vpack.c.bf16 %v646, %v637
  %v746 = vpack.c.bf16 %v647, %v638
  %v747 = vpack.c.bf16 %v648, %v639
  %v748 = vpack.c.bf16 %v649, %v640
  %v749 = vpack.c.bf16 %v650, %v641
  %v750 = vpack.c.bf16 %v651, %v642
  %v751 = vpack.c.bf16 %v652, %v643
  %v752 = vpack.c.bf16 %v662, %v653
  %v753 = vpack.c.bf16 %v663, %v654
  %v754 = vpack.c.bf16 %v664, %v655
  %v755 = vpack.c.bf16 %v665, %v656
  %v756 = vpack.c.bf16 %v666, %v657
  %v757 = vpack.c.bf16 %v667, %v658
  %v758 = vpack.c.bf16 %v668, %v659
  %v759 = vpack.c.bf16 %v669, %v660
  %v760 = vpack.c.bf16 %v670, %v661
  %v761 = vpack.c.bf16 %v680, %v671
  %v762 = vpack.c.bf16 %v681, %v672
  %v763 = vpack.c.bf16 %v682, %v673
  %v764 = vpack.c.bf16 %v683, %v674
  %v765 = vpack.c.bf16 %v684, %v675
  %v766 = vpack.c.bf16 %v685, %v676
  %v767 = vpack.c.bf16 %v686, %v677
  %v768 = vpack.c.bf16 %v687, %v678
  %v769 = vpack.c.bf16 %v688, %v679
  %v770 = vpack.c.bf16 %v698, %v689
  %v771 = vpack.c.bf16 %v699, %v690
  %v772 = vpack.c.bf16 %v700, %v691
  %v773 = vpack.c.bf16 %v701, %v692
  %v774 = vpack.c.bf16 %v702, %v693
  %v775 = vpack.c.bf16 %v703, %v694
  %v776 = vpack.c.bf16 %v704, %v695
  %v777 = vpack.c.bf16 %v705, %v696
  %v778 = vpack.c.bf16 %v706, %v697
  %v779 = vld [vmem:[%s1] sm:$0xf]
  %v780 = vld [vmem:[%s1 + $0x4] sm:$0xf]
  %v781 = vld [vmem:[%s1 + $0x8] sm:$0xf]
  %v782 = vld [vmem:[%s1 + $0xc] sm:$0xf]
  %v783 = vld [vmem:[%s1 + $0x10] sm:$0xf]
  %v784 = vld [vmem:[%s1 + $0x14] sm:$0xf]
  %v785 = vld [vmem:[%s1 + $0x18] sm:$0xf]
  %v786 = vld [vmem:[%s1 + $0x1c] sm:$0xf]
  %v787 = vld [vmem:[%s1 + $0x20] sm:$0xf]
  %v788 = vld [vmem:[%s1 + $0x24] sm:$0xf]
  %v789 = vld [vmem:[%s1 + $0x28] sm:$0xf]
  %v790 = vld [vmem:[%s1 + $0x2c] sm:$0xf]
  %v791 = vld [vmem:[%s1 + $0x30] sm:$0xf]
  %v792 = vld [vmem:[%s1 + $0x34] sm:$0xf]
  %v793 = vld [vmem:[%s1 + $0x38] sm:$0xf]
  %v794 = vld [vmem:[%s1 + $0x3c] sm:$0xf]
  %v795 = vld [vmem:[%s1 + $0x40] sm:$0xf]
  %v796 = vld [vmem:[%s1 + $0x44] sm:$0xf]
  %v797 = vld [vmem:[%s1 + $0x48] sm:$0xf]
  %v798 = vld [vmem:[%s1 + $0x4c] sm:$0xf]
  %v799 = vld [vmem:[%s1 + $0x50] sm:$0xf]
  %v800 = vld [vmem:[%s1 + $0x54] sm:$0xf]
  %v801 = vld [vmem:[%s1 + $0x58] sm:$0xf]
  %v802 = vld [vmem:[%s1 + $0x5c] sm:$0xf]
  %v803 = vld [vmem:[%s1 + $0x60] sm:$0xf]
  %v804 = vld [vmem:[%s1 + $0x64] sm:$0xf]
  %v805 = vld [vmem:[%s1 + $0x68] sm:$0xf]
  %v806 = vld [vmem:[%s1 + $0x6c] sm:$0xf]
  %v807 = vld [vmem:[%s1 + $0x70] sm:$0xf]
  %v808 = vld [vmem:[%s1 + $0x74] sm:$0xf]
  %v809 = vld [vmem:[%s1 + $0x78] sm:$0xf]
  %v810 = vld [vmem:[%s1 + $0x7c] sm:$0xf]
  %v811 = vld [vmem:[%s1 + $0x80] sm:$0xf]
  %v812 = vld [vmem:[%s1 + $0x84] sm:$0xf]
  %v813 = vld [vmem:[%s1 + $0x88] sm:$0xf]
  %v814 = vld [vmem:[%s1 + $0x8c] sm:$0xf]
  %v815 = vld [vmem:[%s1 + $0x90] sm:$0xf]
  %v816 = vld [vmem:[%s1 + $0x94] sm:$0xf]
  %v817 = vld [vmem:[%s1 + $0x98] sm:$0xf]
  %v818 = vld [vmem:[%s1 + $0x9c] sm:$0xf]
  %v819 = vld [vmem:[%s1 + $0xa0] sm:$0xf]
  %v820 = vld [vmem:[%s1 + $0xa4] sm:$0xf]
  %v821 = vld [vmem:[%s1 + $0xa8] sm:$0xf]
  %v822 = vld [vmem:[%s1 + $0xac] sm:$0xf]
  %v823 = vld [vmem:[%s1 + $0xb0] sm:$0xf]
  %v824 = vld [vmem:[%s1 + $0xb4] sm:$0xf]
  %v825 = vld [vmem:[%s1 + $0xb8] sm:$0xf]
  %v826 = vld [vmem:[%s1 + $0xbc] sm:$0xf]
  %v827 = vld [vmem:[%s1 + $0xc0] sm:$0xf]
  %v828 = vld [vmem:[%s1 + $0xc4] sm:$0xf]
  %v829 = vld [vmem:[%s1 + $0xc8] sm:$0xf]
  %v830 = vld [vmem:[%s1 + $0xcc] sm:$0xf]
  %v831 = vld [vmem:[%s1 + $0xd0] sm:$0xf]
  %v832 = vld [vmem:[%s1 + $0xd4] sm:$0xf]
  %v833 = vld [vmem:[%s1 + $0xd8] sm:$0xf]
  %v834 = vld [vmem:[%s1 + $0xdc] sm:$0xf]
  %v835 = vld [vmem:[%s1 + $0xe0] sm:$0xf]
  %v836 = vld [vmem:[%s1 + $0xe4] sm:$0xf]
  %v837 = vld [vmem:[%s1 + $0xe8] sm:$0xf]
  %v838 = vld [vmem:[%s1 + $0xec] sm:$0xf]
  %v839 = vld [vmem:[%s1 + $0xf0] sm:$0xf]
  %v840 = vld [vmem:[%s1 + $0xf4] sm:$0xf]
  %v841 = vld [vmem:[%s1 + $0xf8] sm:$0xf]
  %v842 = vld [vmem:[%s1 + $0xfc] sm:$0xf]
  %v843 = vld [vmem:[%s1 + $0x100] sm:$0xf]
  %v844 = vld [vmem:[%s1 + $0x104] sm:$0xf]
  %v845 = vld [vmem:[%s1 + $0x108] sm:$0xf]
  %v846 = vld [vmem:[%s1 + $0x10c] sm:$0xf]
  %v847 = vld [vmem:[%s1 + $0x110] sm:$0xf]
  %v848 = vld [vmem:[%s1 + $0x114] sm:$0xf]
  %v849 = vld [vmem:[%s1 + $0x118] sm:$0xf]
  %v850 = vld [vmem:[%s1 + $0x11c] sm:$0xf]
  %v851 = vld [vmem:[%s1 + $0x120] sm:$0xf]
  %v852 = vld [vmem:[%s1 + $0x124] sm:$0xf]
  %v853 = vld [vmem:[%s1 + $0x128] sm:$0xf]
  %v854 = vld [vmem:[%s1 + $0x12c] sm:$0xf]
  %v855 = vld [vmem:[%s1 + $0x130] sm:$0xf]
  %v856 = vld [vmem:[%s1 + $0x134] sm:$0xf]
  %v857 = vld [vmem:[%s1 + $0x138] sm:$0xf]
  %v858 = vld [vmem:[%s1 + $0x13c] sm:$0xf]
  %v859 = vld [vmem:[%s1 + $0x140] sm:$0xf]
  %v860 = vld [vmem:[%s1 + $0x144] sm:$0xf]
  %v861 = vld [vmem:[%s1 + $0x148] sm:$0xf]
  %v862 = vld [vmem:[%s1 + $0x14c] sm:$0xf]
  %v863 = vld [vmem:[%s1 + $0x150] sm:$0xf]
  %v864 = vld [vmem:[%s1 + $0x154] sm:$0xf]
  %v865 = vld [vmem:[%s1 + $0x158] sm:$0xf]
  %v866 = vld [vmem:[%s1 + $0x15c] sm:$0xf]
  %v867 = vld [vmem:[%s1 + $0x160] sm:$0xf]
  %v868 = vld [vmem:[%s1 + $0x164] sm:$0xf]
  %v869 = vld [vmem:[%s1 + $0x168] sm:$0xf]
  %v870 = vld [vmem:[%s1 + $0x16c] sm:$0xf]
  %v871 = vld [vmem:[%s1 + $0x170] sm:$0xf]
  %v872 = vld [vmem:[%s1 + $0x174] sm:$0xf]
  %v873 = vld [vmem:[%s1 + $0x178] sm:$0xf]
  %v874 = vld [vmem:[%s1 + $0x17c] sm:$0xf]
  %v875 = vld [vmem:[%s1 + $0x180] sm:$0xf]
  %v876 = vld [vmem:[%s1 + $0x184] sm:$0xf]
  %v877 = vld [vmem:[%s1 + $0x188] sm:$0xf]
  %v878 = vld [vmem:[%s1 + $0x18c] sm:$0xf]
  %v879 = vld [vmem:[%s1 + $0x190] sm:$0xf]
  %v880 = vld [vmem:[%s1 + $0x194] sm:$0xf]
  %v881 = vld [vmem:[%s1 + $0x198] sm:$0xf]
  %v882 = vld [vmem:[%s1 + $0x19c] sm:$0xf]
  %v883 = vld [vmem:[%s1 + $0x1a0] sm:$0xf]
  %v884 = vld [vmem:[%s1 + $0x1a4] sm:$0xf]
  %v885 = vld [vmem:[%s1 + $0x1a8] sm:$0xf]
  %v886 = vld [vmem:[%s1 + $0x1ac] sm:$0xf]
  %v887 = vld [vmem:[%s1 + $0x1b0] sm:$0xf]
  %v888 = vld [vmem:[%s1 + $0x1b4] sm:$0xf]
  %v889 = vld [vmem:[%s1 + $0x1b8] sm:$0xf]
  %v890 = vld [vmem:[%s1 + $0x1bc] sm:$0xf]
  %v891 = vld [vmem:[%s1 + $0x1c0] sm:$0xf]
  %v892 = vld [vmem:[%s1 + $0x1c4] sm:$0xf]
  %v893 = vld [vmem:[%s1 + $0x1c8] sm:$0xf]
  %v894 = vld [vmem:[%s1 + $0x1cc] sm:$0xf]
  %v895 = vld [vmem:[%s1 + $0x1d0] sm:$0xf]
  %v896 = vld [vmem:[%s1 + $0x1d4] sm:$0xf]
  %v897 = vld [vmem:[%s1 + $0x1d8] sm:$0xf]
  %v898 = vld [vmem:[%s1 + $0x1dc] sm:$0xf]
  %v899 = vld [vmem:[%s1 + $0x1e0] sm:$0xf]
  %v900 = vld [vmem:[%s1 + $0x1e4] sm:$0xf]
  %v901 = vld [vmem:[%s1 + $0x1e8] sm:$0xf]
  %v902 = vld [vmem:[%s1 + $0x1ec] sm:$0xf]
  %v903 = vld [vmem:[%s1 + $0x1f0] sm:$0xf]
  %v904 = vld [vmem:[%s1 + $0x1f4] sm:$0xf]
  %v905 = vld [vmem:[%s1 + $0x1f8] sm:$0xf]
  %v906 = vld [vmem:[%s1 + $0x1fc] sm:$0xf]
  %v907 = vld [vmem:[%s1 + $0x200] sm:$0xf]
  %v908 = vld [vmem:[%s1 + $0x204] sm:$0xf]
  %v909 = vld [vmem:[%s1 + $0x208] sm:$0xf]
  %v910 = vld [vmem:[%s1 + $0x20c] sm:$0xf]
  %v911 = vld [vmem:[%s1 + $0x210] sm:$0xf]
  %v912 = vld [vmem:[%s1 + $0x214] sm:$0xf]
  %v913 = vld [vmem:[%s1 + $0x218] sm:$0xf]
  %v914 = vld [vmem:[%s1 + $0x21c] sm:$0xf]
  %v915 = vld [vmem:[%s1 + $0x220] sm:$0xf]
  %v916 = vld [vmem:[%s1 + $0x224] sm:$0xf]
  %v917 = vld [vmem:[%s1 + $0x228] sm:$0xf]
  %v918 = vld [vmem:[%s1 + $0x22c] sm:$0xf]
  %v919 = vld [vmem:[%s1 + $0x230] sm:$0xf]
  %v920 = vld [vmem:[%s1 + $0x234] sm:$0xf]
  %v921 = vld [vmem:[%s1 + $0x238] sm:$0xf]
  %v922 = vld [vmem:[%s1 + $0x23c] sm:$0xf]
  %v923 = vld [vmem:[%s2] sm:$0x1]
  %v925 = vlaneseq
  %v926 = vshrl.u32 %v925, 7
  %v927 = vsub.s32 0, %v926
  %v928 = vrot.slane %v923, %v927
  %v1074 = vunpack.c.l.b16 %v779
  %v1075 = vunpack.c.l.b16 %v780
  %v1076 = vunpack.c.l.b16 %v781
  %v1077 = vunpack.c.l.b16 %v782
  %v1078 = vunpack.c.l.b16 %v783
  %v1079 = vunpack.c.l.b16 %v784
  %v1080 = vunpack.c.l.b16 %v785
  %v1081 = vunpack.c.l.b16 %v786
  %v1082 = vunpack.c.l.b16 %v787
  %v1083 = vunpack.c.l.b16 %v788
  %v1084 = vunpack.c.l.b16 %v789
  %v1085 = vunpack.c.l.b16 %v790
  %v1086 = vunpack.c.l.b16 %v791
  %v1087 = vunpack.c.l.b16 %v792
  %v1088 = vunpack.c.l.b16 %v793
  %v1089 = vunpack.c.l.b16 %v794
  %v1090 = vunpack.c.l.b16 %v795
  %v1091 = vunpack.c.l.b16 %v796
  %v1092 = vunpack.c.l.b16 %v797
  %v1093 = vunpack.c.l.b16 %v798
  %v1094 = vunpack.c.l.b16 %v799
  %v1095 = vunpack.c.l.b16 %v800
  %v1096 = vunpack.c.l.b16 %v801
  %v1097 = vunpack.c.l.b16 %v802
  %v1098 = vunpack.c.l.b16 %v803
  %v1099 = vunpack.c.l.b16 %v804
  %v1100 = vunpack.c.l.b16 %v805
  %v1101 = vunpack.c.l.b16 %v806
  %v1102 = vunpack.c.l.b16 %v807
  %v1103 = vunpack.c.l.b16 %v808
  %v1104 = vunpack.c.l.b16 %v809
  %v1105 = vunpack.c.l.b16 %v810
  %v1106 = vunpack.c.l.b16 %v811
  %v1107 = vunpack.c.l.b16 %v812
  %v1108 = vunpack.c.l.b16 %v813
  %v1109 = vunpack.c.l.b16 %v814
  %v1110 = vunpack.c.l.b16 %v815
  %v1111 = vunpack.c.l.b16 %v816
  %v1112 = vunpack.c.l.b16 %v817
  %v1113 = vunpack.c.l.b16 %v818
  %v1114 = vunpack.c.l.b16 %v819
  %v1115 = vunpack.c.l.b16 %v820
  %v1116 = vunpack.c.l.b16 %v821
  %v1117 = vunpack.c.l.b16 %v822
  %v1118 = vunpack.c.l.b16 %v823
  %v1119 = vunpack.c.l.b16 %v824
  %v1120 = vunpack.c.l.b16 %v825
  %v1121 = vunpack.c.l.b16 %v826
  %v1122 = vunpack.c.l.b16 %v827
  %v1123 = vunpack.c.l.b16 %v828
  %v1124 = vunpack.c.l.b16 %v829
  %v1125 = vunpack.c.l.b16 %v830
  %v1126 = vunpack.c.l.b16 %v831
  %v1127 = vunpack.c.l.b16 %v832
  %v1128 = vunpack.c.l.b16 %v833
  %v1129 = vunpack.c.l.b16 %v834
  %v1130 = vunpack.c.l.b16 %v835
  %v1131 = vunpack.c.l.b16 %v836
  %v1132 = vunpack.c.l.b16 %v837
  %v1133 = vunpack.c.l.b16 %v838
  %v1134 = vunpack.c.l.b16 %v839
  %v1135 = vunpack.c.l.b16 %v840
  %v1136 = vunpack.c.l.b16 %v841
  %v1137 = vunpack.c.l.b16 %v842
  %v1138 = vunpack.c.l.b16 %v843
  %v1139 = vunpack.c.l.b16 %v844
  %v1140 = vunpack.c.l.b16 %v845
  %v1141 = vunpack.c.l.b16 %v846
  %v1142 = vunpack.c.l.b16 %v847
  %v1143 = vunpack.c.l.b16 %v848
  %v1144 = vunpack.c.l.b16 %v849
  %v1145 = vunpack.c.l.b16 %v850
  %v1146 = vunpack.c.l.b16 %v851
  %v1147 = vunpack.c.l.b16 %v852
  %v1148 = vunpack.c.l.b16 %v853
  %v1149 = vunpack.c.l.b16 %v854
  %v1150 = vunpack.c.l.b16 %v855
  %v1151 = vunpack.c.l.b16 %v856
  %v1152 = vunpack.c.l.b16 %v857
  %v1153 = vunpack.c.l.b16 %v858
  %v1154 = vunpack.c.l.b16 %v859
  %v1155 = vunpack.c.l.b16 %v860
  %v1156 = vunpack.c.l.b16 %v861
  %v1157 = vunpack.c.l.b16 %v862
  %v1158 = vunpack.c.l.b16 %v863
  %v1159 = vunpack.c.l.b16 %v864
  %v1160 = vunpack.c.l.b16 %v865
  %v1161 = vunpack.c.l.b16 %v866
  %v1162 = vunpack.c.l.b16 %v867
  %v1163 = vunpack.c.l.b16 %v868
  %v1164 = vunpack.c.l.b16 %v869
  %v1165 = vunpack.c.l.b16 %v870
  %v1166 = vunpack.c.l.b16 %v871
  %v1167 = vunpack.c.l.b16 %v872
  %v1168 = vunpack.c.l.b16 %v873
  %v1169 = vunpack.c.l.b16 %v874
  %v1170 = vunpack.c.l.b16 %v875
  %v1171 = vunpack.c.l.b16 %v876
  %v1172 = vunpack.c.l.b16 %v877
  %v1173 = vunpack.c.l.b16 %v878
  %v1174 = vunpack.c.l.b16 %v879
  %v1175 = vunpack.c.l.b16 %v880
  %v1176 = vunpack.c.l.b16 %v881
  %v1177 = vunpack.c.l.b16 %v882
  %v1178 = vunpack.c.l.b16 %v883
  %v1179 = vunpack.c.l.b16 %v884
  %v1180 = vunpack.c.l.b16 %v885
  %v1181 = vunpack.c.l.b16 %v886
  %v1182 = vunpack.c.l.b16 %v887
  %v1183 = vunpack.c.l.b16 %v888
  %v1184 = vunpack.c.l.b16 %v889
  %v1185 = vunpack.c.l.b16 %v890
  %v1186 = vunpack.c.l.b16 %v891
  %v1187 = vunpack.c.l.b16 %v892
  %v1188 = vunpack.c.l.b16 %v893
  %v1189 = vunpack.c.l.b16 %v894
  %v1190 = vunpack.c.l.b16 %v895
  %v1191 = vunpack.c.l.b16 %v896
  %v1192 = vunpack.c.l.b16 %v897
  %v1193 = vunpack.c.l.b16 %v898
  %v1194 = vunpack.c.l.b16 %v899
  %v1195 = vunpack.c.l.b16 %v900
  %v1196 = vunpack.c.l.b16 %v901
  %v1197 = vunpack.c.l.b16 %v902
  %v1198 = vunpack.c.l.b16 %v903
  %v1199 = vunpack.c.l.b16 %v904
  %v1200 = vunpack.c.l.b16 %v905
  %v1201 = vunpack.c.l.b16 %v906
  %v1202 = vunpack.c.l.b16 %v907
  %v1203 = vunpack.c.l.b16 %v908
  %v1204 = vunpack.c.l.b16 %v909
  %v1205 = vunpack.c.l.b16 %v910
  %v1206 = vunpack.c.l.b16 %v911
  %v1207 = vunpack.c.l.b16 %v912
  %v1208 = vunpack.c.l.b16 %v913
  %v1209 = vunpack.c.l.b16 %v914
  %v1210 = vunpack.c.l.b16 %v915
  %v1211 = vunpack.c.l.b16 %v916
  %v1212 = vunpack.c.l.b16 %v917
  %v1213 = vunpack.c.l.b16 %v918
  %v1214 = vunpack.c.l.b16 %v919
  %v1215 = vunpack.c.l.b16 %v920
  %v1216 = vunpack.c.l.b16 %v921
  %v1217 = vunpack.c.l.b16 %v922
  %v1218 = vpack.c.b16 %v1075, %v1074
  %v1219 = vpack.c.b16 %v1077, %v1076
  %v1220 = vpack.c.b16 %v1079, %v1078
  %v1221 = vpack.c.b16 %v1081, %v1080
  %v1222 = vpack.c.b16 %v1083, %v1082
  %v1223 = vpack.c.b16 %v1085, %v1084
  %v1224 = vpack.c.b16 %v1087, %v1086
  %v1225 = vpack.c.b16 %v1089, %v1088
  %v1226 = vpack.c.b16 %v1091, %v1090
  %v1227 = vpack.c.b16 %v1093, %v1092
  %v1228 = vpack.c.b16 %v1095, %v1094
  %v1229 = vpack.c.b16 %v1097, %v1096
  %v1230 = vpack.c.b16 %v1099, %v1098
  %v1231 = vpack.c.b16 %v1101, %v1100
  %v1232 = vpack.c.b16 %v1103, %v1102
  %v1233 = vpack.c.b16 %v1105, %v1104
  %v1234 = vpack.c.b16 %v1107, %v1106
  %v1235 = vpack.c.b16 %v1109, %v1108
  %v1236 = vpack.c.b16 %v1111, %v1110
  %v1237 = vpack.c.b16 %v1113, %v1112
  %v1238 = vpack.c.b16 %v1115, %v1114
  %v1239 = vpack.c.b16 %v1117, %v1116
  %v1240 = vpack.c.b16 %v1119, %v1118
  %v1241 = vpack.c.b16 %v1121, %v1120
  %v1242 = vpack.c.b16 %v1123, %v1122
  %v1243 = vpack.c.b16 %v1125, %v1124
  %v1244 = vpack.c.b16 %v1127, %v1126
  %v1245 = vpack.c.b16 %v1129, %v1128
  %v1246 = vpack.c.b16 %v1131, %v1130
  %v1247 = vpack.c.b16 %v1133, %v1132
  %v1248 = vpack.c.b16 %v1135, %v1134
  %v1249 = vpack.c.b16 %v1137, %v1136
  %v1250 = vpack.c.b16 %v1139, %v1138
  %v1251 = vpack.c.b16 %v1141, %v1140
  %v1252 = vpack.c.b16 %v1143, %v1142
  %v1253 = vpack.c.b16 %v1145, %v1144
  %v1254 = vpack.c.b16 %v1147, %v1146
  %v1255 = vpack.c.b16 %v1149, %v1148
  %v1256 = vpack.c.b16 %v1151, %v1150
  %v1257 = vpack.c.b16 %v1153, %v1152
  %v1258 = vpack.c.b16 %v1155, %v1154
  %v1259 = vpack.c.b16 %v1157, %v1156
  %v1260 = vpack.c.b16 %v1159, %v1158
  %v1261 = vpack.c.b16 %v1161, %v1160
  %v1262 = vpack.c.b16 %v1163, %v1162
  %v1263 = vpack.c.b16 %v1165, %v1164
  %v1264 = vpack.c.b16 %v1167, %v1166
  %v1265 = vpack.c.b16 %v1169, %v1168
  %v1266 = vpack.c.b16 %v1171, %v1170
  %v1267 = vpack.c.b16 %v1173, %v1172
  %v1268 = vpack.c.b16 %v1175, %v1174
  %v1269 = vpack.c.b16 %v1177, %v1176
  %v1270 = vpack.c.b16 %v1179, %v1178
  %v1271 = vpack.c.b16 %v1181, %v1180
  %v1272 = vpack.c.b16 %v1183, %v1182
  %v1273 = vpack.c.b16 %v1185, %v1184
  %v1274 = vpack.c.b16 %v1187, %v1186
  %v1275 = vpack.c.b16 %v1189, %v1188
  %v1276 = vpack.c.b16 %v1191, %v1190
  %v1277 = vpack.c.b16 %v1193, %v1192
  %v1278 = vpack.c.b16 %v1195, %v1194
  %v1279 = vpack.c.b16 %v1197, %v1196
  %v1280 = vpack.c.b16 %v1199, %v1198
  %v1281 = vpack.c.b16 %v1201, %v1200
  %v1282 = vpack.c.b16 %v1203, %v1202
  %v1283 = vpack.c.b16 %v1205, %v1204
  %v1284 = vpack.c.b16 %v1207, %v1206
  %v1285 = vpack.c.b16 %v1209, %v1208
  %v1286 = vpack.c.b16 %v1211, %v1210
  %v1287 = vpack.c.b16 %v1213, %v1212
  %v1288 = vpack.c.b16 %v1215, %v1214
  %v1289 = vpack.c.b16 %v1217, %v1216
  %1362 = vmatprep.subr.bf16.mxu0 0
  %1363 = vmatpush1.bf16.msra.mxu0 %v1218
  %1364 = vmatprep.subr.bf16.mxu0 0
  %1365 = vmatpush1.bf16.msra.mxu0 %v1219
  %1366 = vmatprep.subr.bf16.mxu0 0
  %1367 = vmatpush1.bf16.msra.mxu0 %v1220
  %1368 = vmatprep.subr.bf16.mxu0 0
  %1369 = vmatpush1.bf16.msra.mxu0 %v1221
  %1370 = vmatprep.subr.bf16.mxu0 0
  %1371 = vmatpush1.bf16.msra.mxu0 %v1222
  %1372 = vmatprep.subr.bf16.mxu0 0
  %1373 = vmatpush1.bf16.msra.mxu0 %v1223
  %1374 = vmatprep.subr.bf16.mxu0 0
  %1375 = vmatpush1.bf16.msra.mxu0 %v1224
  %1376 = vmatprep.subr.bf16.mxu0 0
  %1377 = vmatpush1.bf16.msra.mxu0 %v1225
  %1378 = vmatprep.subr.bf16.mxu0 0
  %1379 = vmatpush1.bf16.msra.mxu0 %v1226
  %1380 = vmatprep.subr.bf16.mxu0 0
  %1381 = vmatpush1.bf16.msra.mxu0 %v1227
  %1382 = vmatprep.subr.bf16.mxu0 0
  %1383 = vmatpush1.bf16.msra.mxu0 %v1228
  %1384 = vmatprep.subr.bf16.mxu0 0
  %1385 = vmatpush1.bf16.msra.mxu0 %v1229
  %1386 = vmatprep.subr.bf16.mxu0 0
  %1387 = vmatpush1.bf16.msra.mxu0 %v1230
  %1388 = vmatprep.subr.bf16.mxu0 0
  %1389 = vmatpush1.bf16.msra.mxu0 %v1231
  %1390 = vmatprep.subr.bf16.mxu0 0
  %1391 = vmatpush1.bf16.msra.mxu0 %v1232
  %1392 = vmatprep.subr.bf16.mxu0 0
  %1393 = vmatpush1.bf16.msra.mxu0 %v1233
  %1394 = vmatprep.mubr.bf16.mxu0 %v708
  %1395 = vmatmul.mubr.bf16.gmra.mrb[0].mxu0 %v707
  %v1396 = vpop.f32.mrb[0].mxu0
  %v1397 = vadd.f32 %v928, %v1396
  %v1398 = vpop.f32.mrb[0].mxu0
  %v1399 = vpop.f32.mrb[0].mxu0
  %v1400 = vadd.f32 %v928, %v1399
  %v1401 = vpop.f32.mrb[0].mxu0
  %1402 = vmatprep.mubr.bf16.mxu0 %v717
  %1403 = vmatmul.mubr.bf16.gmra.mrb[0].mxu0 %v716
  %v1404 = vpop.f32.mrb[0].mxu0
  %v1405 = vadd.f32 %v928, %v1404
  %v1406 = vpop.f32.mrb[0].mxu0
  %v1407 = vpop.f32.mrb[0].mxu0
  %v1408 = vadd.f32 %v928, %v1407
  %v1409 = vpop.f32.mrb[0].mxu0
  %1410 = vmatprep.mubr.bf16.mxu0 %v726
  %1411 = vmatmul.mubr.bf16.gmra.mrb[0].mxu0 %v725
  %v1412 = vpop.f32.mrb[0].mxu0
  %v1413 = vadd.f32 %v928, %v1412
  %v1414 = vpop.f32.mrb[0].mxu0
  %v1415 = vpop.f32.mrb[0].mxu0
  %v1416 = vadd.f32 %v928, %v1415
  %v1417 = vpop.f32.mrb[0].mxu0
  %1418 = vmatprep.mubr.bf16.mxu0 %v735
  %1419 = vmatmul.mubr.bf16.gmra.mrb[0].mxu0 %v734
  %v1420 = vpop.f32.mrb[0].mxu0
  %v1421 = vadd.f32 %v928, %v1420
  %v1422 = vpop.f32.mrb[0].mxu0
  %v1423 = vpop.f32.mrb[0].mxu0
  %v1424 = vadd.f32 %v928, %v1423
  %v1425 = vpop.f32.mrb[0].mxu0
  %1426 = vmatprep.mubr.bf16.mxu0 %v744
  %1427 = vmatmul.mubr.bf16.gmra.mrb[0].mxu0 %v743
  %v1428 = vpop.f32.mrb[0].mxu0
  %v1429 = vadd.f32 %v928, %v1428
  %v1430 = vpop.f32.mrb[0].mxu0
  %v1431 = vpop.f32.mrb[0].mxu0
  %v1432 = vadd.f32 %v928, %v1431
  %v1433 = vpop.f32.mrb[0].mxu0
  %1434 = vmatprep.mubr.bf16.mxu0 %v753
  %1435 = vmatmul.mubr.bf16.gmra.mrb[0].mxu0 %v752
  %v1436 = vpop.f32.mrb[0].mxu0
  %v1437 = vadd.f32 %v928, %v1436
  %v1438 = vpop.f32.mrb[0].mxu0
  %v1439 = vpop.f32.mrb[0].mxu0
  %v1440 = vadd.f32 %v928, %v1439
  %v1441 = vpop.f32.mrb[0].mxu0
  %1442 = vmatprep.mubr.bf16.mxu0 %v762
  %1443 = vmatmul.mubr.bf16.gmra.mrb[0].mxu0 %v761
  %v1444 = vpop.f32.mrb[0].mxu0
  %v1445 = vadd.f32 %v928, %v1444
  %v1446 = vpop.f32.mrb[0].mxu0
  %v1447 = vpop.f32.mrb[0].mxu0
  %v1448 = vadd.f32 %v928, %v1447
  %v1449 = vpop.f32.mrb[0].mxu0
  %1450 = vmatprep.mubr.bf16.mxu0 %v771
  %1451 = vmatmul.mubr.bf16.gmra.mrb[0].mxu0 %v770
  %v1452 = vpop.f32.mrb[0].mxu0
  %v1453 = vadd.f32 %v928, %v1452
  %v1454 = vpop.f32.mrb[0].mxu0
  %v1455 = vpop.f32.mrb[0].mxu0
  %v1456 = vadd.f32 %v928, %v1455
  %v1457 = vpop.f32.mrb[0].mxu0
  %1458 = vdwg.mxu0
  %1459 = vmatprep.subr.bf16.mxu0 0
  %1460 = vmatpush1.bf16.msra.mxu0 %v1234
  %1461 = vmatprep.subr.bf16.mxu0 0
  %1462 = vmatpush1.bf16.msra.mxu0 %v1235
  %1463 = vmatprep.subr.bf16.mxu0 0
  %1464 = vmatpush1.bf16.msra.mxu0 %v1236
  %1465 = vmatprep.subr.bf16.mxu0 0
  %1466 = vmatpush1.bf16.msra.mxu0 %v1237
  %1467 = vmatprep.subr.bf16.mxu0 0
  %1468 = vmatpush1.bf16.msra.mxu0 %v1238
  %1469 = vmatprep.subr.bf16.mxu0 0
  %1470 = vmatpush1.bf16.msra.mxu0 %v1239
  %1471 = vmatprep.subr.bf16.mxu0 0
  %1472 = vmatpush1.bf16.msra.mxu0 %v1240
  %1473 = vmatprep.subr.bf16.mxu0 0
  %1474 = vmatpush1.bf16.msra.mxu0 %v1241
  %1475 = vmatprep.subr.bf16.mxu0 0
  %1476 = vmatpush1.bf16.msra.mxu0 %v1242
  %1477 = vmatprep.subr.bf16.mxu0 0
  %1478 = vmatpush1.bf16.msra.mxu0 %v1243
  %1479 = vmatprep.subr.bf16.mxu0 0
  %1480 = vmatpush1.bf16.msra.mxu0 %v1244
  %1481 = vmatprep.subr.bf16.mxu0 0
  %1482 = vmatpush1.bf16.msra.mxu0 %v1245
  %1483 = vmatprep.subr.bf16.mxu0 0
  %1484 = vmatpush1.bf16.msra.mxu0 %v1246
  %1485 = vmatprep.subr.bf16.mxu0 0
  %1486 = vmatpush1.bf16.msra.mxu0 %v1247
  %1487 = vmatprep.subr.bf16.mxu0 0
  %1488 = vmatpush1.bf16.msra.mxu0 %v1248
  %1489 = vmatprep.subr.bf16.mxu0 0
  %1490 = vmatpush1.bf16.msra.mxu0 %v1249
  %1491 = vmatprep.mubr.bf16.mxu0 %v710
  %1492 = vmatmul.mubr.bf16.gmra.mrb[0].mxu0 %v709
  %v1493 = vpop.f32.mrb[0].mxu0
  %v1494 = vadd.f32 %v1397, %v1493
  %v1495 = vpop.f32.mrb[0].mxu0
  %v1496 = vpop.f32.mrb[0].mxu0
  %v1497 = vadd.f32 %v1400, %v1496
  %v1498 = vpop.f32.mrb[0].mxu0
  %1499 = vmatprep.mubr.bf16.mxu0 %v719
  %1500 = vmatmul.mubr.bf16.gmra.mrb[0].mxu0 %v718
  %v1501 = vpop.f32.mrb[0].mxu0
  %v1502 = vadd.f32 %v1405, %v1501
  %v1503 = vpop.f32.mrb[0].mxu0
  %v1504 = vpop.f32.mrb[0].mxu0
  %v1505 = vadd.f32 %v1408, %v1504
  %v1506 = vpop.f32.mrb[0].mxu0
  %1507 = vmatprep.mubr.bf16.mxu0 %v728
  %1508 = vmatmul.mubr.bf16.gmra.mrb[0].mxu0 %v727
  %v1509 = vpop.f32.mrb[0].mxu0
  %v1510 = vadd.f32 %v1413, %v1509
  %v1511 = vpop.f32.mrb[0].mxu0
  %v1512 = vpop.f32.mrb[0].mxu0
  %v1513 = vadd.f32 %v1416, %v1512
  %v1514 = vpop.f32.mrb[0].mxu0
  %1515 = vmatprep.mubr.bf16.mxu0 %v737
  %1516 = vmatmul.mubr.bf16.gmra.mrb[0].mxu0 %v736
  %v1517 = vpop.f32.mrb[0].mxu0
  %v1518 = vadd.f32 %v1421, %v1517
  %v1519 = vpop.f32.mrb[0].mxu0
  %v1520 = vpop.f32.mrb[0].mxu0
  %v1521 = vadd.f32 %v1424, %v1520
  %v1522 = vpop.f32.mrb[0].mxu0
  %1523 = vmatprep.mubr.bf16.mxu0 %v746
  %1524 = vmatmul.mubr.bf16.gmra.mrb[0].mxu0 %v745
  %v1525 = vpop.f32.mrb[0].mxu0
  %v1526 = vadd.f32 %v1429, %v1525
  %v1527 = vpop.f32.mrb[0].mxu0
  %v1528 = vpop.f32.mrb[0].mxu0
  %v1529 = vadd.f32 %v1432, %v1528
  %v1530 = vpop.f32.mrb[0].mxu0
  %1531 = vmatprep.mubr.bf16.mxu0 %v755
  %1532 = vmatmul.mubr.bf16.gmra.mrb[0].mxu0 %v754
  %v1533 = vpop.f32.mrb[0].mxu0
  %v1534 = vadd.f32 %v1437, %v1533
  %v1535 = vpop.f32.mrb[0].mxu0
  %v1536 = vpop.f32.mrb[0].mxu0
  %v1537 = vadd.f32 %v1440, %v1536
  %v1538 = vpop.f32.mrb[0].mxu0
  %1539 = vmatprep.mubr.bf16.mxu0 %v764
  %1540 = vmatmul.mubr.bf16.gmra.mrb[0].mxu0 %v763
  %v1541 = vpop.f32.mrb[0].mxu0
  %v1542 = vadd.f32 %v1445, %v1541
  %v1543 = vpop.f32.mrb[0].mxu0
  %v1544 = vpop.f32.mrb[0].mxu0
  %v1545 = vadd.f32 %v1448, %v1544
  %v1546 = vpop.f32.mrb[0].mxu0
  %1547 = vmatprep.mubr.bf16.mxu0 %v773
  %1548 = vmatmul.mubr.bf16.gmra.mrb[0].mxu0 %v772
  %v1549 = vpop.f32.mrb[0].mxu0
  %v1550 = vadd.f32 %v1453, %v1549
  %v1551 = vpop.f32.mrb[0].mxu0
  %v1552 = vpop.f32.mrb[0].mxu0
  %v1553 = vadd.f32 %v1456, %v1552
  %v1554 = vpop.f32.mrb[0].mxu0
  %1555 = vdwg.mxu0
  %1556 = vmatprep.subr.bf16.mxu0 0
  %1557 = vmatpush1.bf16.msra.mxu0 %v1250
  %1558 = vmatprep.subr.bf16.mxu0 0
  %1559 = vmatpush1.bf16.msra.mxu0 %v1251
  %1560 = vmatprep.subr.bf16.mxu0 0
  %1561 = vmatpush1.bf16.msra.mxu0 %v1252
  %1562 = vmatprep.subr.bf16.mxu0 0
  %1563 = vmatpush1.bf16.msra.mxu0 %v1253
  %1564 = vmatprep.subr.bf16.mxu0 0
  %1565 = vmatpush1.bf16.msra.mxu0 %v1254
  %1566 = vmatprep.subr.bf16.mxu0 0
  %1567 = vmatpush1.bf16.msra.mxu0 %v1255
  %1568 = vmatprep.subr.bf16.mxu0 0
  %1569 = vmatpush1.bf16.msra.mxu0 %v1256
  %1570 = vmatprep.subr.bf16.mxu0 0
  %1571 = vmatpush1.bf16.msra.mxu0 %v1257
  %1572 = vmatprep.subr.bf16.mxu0 0
  %1573 = vmatpush1.bf16.msra.mxu0 %v1258
  %1574 = vmatprep.subr.bf16.mxu0 0
  %1575 = vmatpush1.bf16.msra.mxu0 %v1259
  %1576 = vmatprep.subr.bf16.mxu0 0
  %1577 = vmatpush1.bf16.msra.mxu0 %v1260
  %1578 = vmatprep.subr.bf16.mxu0 0
  %1579 = vmatpush1.bf16.msra.mxu0 %v1261
  %1580 = vmatprep.subr.bf16.mxu0 0
  %1581 = vmatpush1.bf16.msra.mxu0 %v1262
  %1582 = vmatprep.subr.bf16.mxu0 0
  %1583 = vmatpush1.bf16.msra.mxu0 %v1263
  %1584 = vmatprep.subr.bf16.mxu0 0
  %1585 = vmatpush1.bf16.msra.mxu0 %v1264
  %1586 = vmatprep.subr.bf16.mxu0 0
  %1587 = vmatpush1.bf16.msra.mxu0 %v1265
  %1588 = vmatprep.mubr.bf16.mxu0 %v712
  %1589 = vmatmul.mubr.bf16.gmra.mrb[0].mxu0 %v711
  %v1590 = vpop.f32.mrb[0].mxu0
  %v1591 = vadd.f32 %v1494, %v1590
  %v1592 = vpop.f32.mrb[0].mxu0
  %v1593 = vpop.f32.mrb[0].mxu0
  %v1594 = vadd.f32 %v1497, %v1593
  %v1595 = vpop.f32.mrb[0].mxu0
  %1596 = vmatprep.mubr.bf16.mxu0 %v721
  %1597 = vmatmul.mubr.bf16.gmra.mrb[0].mxu0 %v720
  %v1598 = vpop.f32.mrb[0].mxu0
  %v1599 = vadd.f32 %v1502, %v1598
  %v1600 = vpop.f32.mrb[0].mxu0
  %v1601 = vpop.f32.mrb[0].mxu0
  %v1602 = vadd.f32 %v1505, %v1601
  %v1603 = vpop.f32.mrb[0].mxu0
  %1604 = vmatprep.mubr.bf16.mxu0 %v730
  %1605 = vmatmul.mubr.bf16.gmra.mrb[0].mxu0 %v729
  %v1606 = vpop.f32.mrb[0].mxu0
  %v1607 = vadd.f32 %v1510, %v1606
  %v1608 = vpop.f32.mrb[0].mxu0
  %v1609 = vpop.f32.mrb[0].mxu0
  %v1610 = vadd.f32 %v1513, %v1609
  %v1611 = vpop.f32.mrb[0].mxu0
  %1612 = vmatprep.mubr.bf16.mxu0 %v739
  %1613 = vmatmul.mubr.bf16.gmra.mrb[0].mxu0 %v738
  %v1614 = vpop.f32.mrb[0].mxu0
  %v1615 = vadd.f32 %v1518, %v1614
  %v1616 = vpop.f32.mrb[0].mxu0
  %v1617 = vpop.f32.mrb[0].mxu0
  %v1618 = vadd.f32 %v1521, %v1617
  %v1619 = vpop.f32.mrb[0].mxu0
  %1620 = vmatprep.mubr.bf16.mxu0 %v748
  %1621 = vmatmul.mubr.bf16.gmra.mrb[0].mxu0 %v747
  %v1622 = vpop.f32.mrb[0].mxu0
  %v1623 = vadd.f32 %v1526, %v1622
  %v1624 = vpop.f32.mrb[0].mxu0
  %v1625 = vpop.f32.mrb[0].mxu0
  %v1626 = vadd.f32 %v1529, %v1625
  %v1627 = vpop.f32.mrb[0].mxu0
  %1628 = vmatprep.mubr.bf16.mxu0 %v757
  %1629 = vmatmul.mubr.bf16.gmra.mrb[0].mxu0 %v756
  %v1630 = vpop.f32.mrb[0].mxu0
  %v1631 = vadd.f32 %v1534, %v1630
  %v1632 = vpop.f32.mrb[0].mxu0
  %v1633 = vpop.f32.mrb[0].mxu0
  %v1634 = vadd.f32 %v1537, %v1633
  %v1635 = vpop.f32.mrb[0].mxu0
  %1636 = vmatprep.mubr.bf16.mxu0 %v766
  %1637 = vmatmul.mubr.bf16.gmra.mrb[0].mxu0 %v765
  %v1638 = vpop.f32.mrb[0].mxu0
  %v1639 = vadd.f32 %v1542, %v1638
  %v1640 = vpop.f32.mrb[0].mxu0
  %v1641 = vpop.f32.mrb[0].mxu0
  %v1642 = vadd.f32 %v1545, %v1641
  %v1643 = vpop.f32.mrb[0].mxu0
  %1644 = vmatprep.mubr.bf16.mxu0 %v775
  %1645 = vmatmul.mubr.bf16.gmra.mrb[0].mxu0 %v774
  %v1646 = vpop.f32.mrb[0].mxu0
  %v1647 = vadd.f32 %v1550, %v1646
  %v1648 = vpop.f32.mrb[0].mxu0
  %v1649 = vpop.f32.mrb[0].mxu0
  %v1650 = vadd.f32 %v1553, %v1649
  %v1651 = vpop.f32.mrb[0].mxu0
  %1652 = vdwg.mxu0
  %1653 = vmatprep.subr.bf16.mxu0 0
  %1654 = vmatpush1.bf16.msra.mxu0 %v1266
  %1655 = vmatprep.subr.bf16.mxu0 0
  %1656 = vmatpush1.bf16.msra.mxu0 %v1267
  %1657 = vmatprep.subr.bf16.mxu0 0
  %1658 = vmatpush1.bf16.msra.mxu0 %v1268
  %1659 = vmatprep.subr.bf16.mxu0 0
  %1660 = vmatpush1.bf16.msra.mxu0 %v1269
  %1661 = vmatprep.subr.bf16.mxu0 0
  %1662 = vmatpush1.bf16.msra.mxu0 %v1270
  %1663 = vmatprep.subr.bf16.mxu0 0
  %1664 = vmatpush1.bf16.msra.mxu0 %v1271
  %1665 = vmatprep.subr.bf16.mxu0 0
  %1666 = vmatpush1.bf16.msra.mxu0 %v1272
  %1667 = vmatprep.subr.bf16.mxu0 0
  %1668 = vmatpush1.bf16.msra.mxu0 %v1273
  %1669 = vmatprep.subr.bf16.mxu0 0
  %1670 = vmatpush1.bf16.msra.mxu0 %v1274
  %1671 = vmatprep.subr.bf16.mxu0 0
  %1672 = vmatpush1.bf16.msra.mxu0 %v1275
  %1673 = vmatprep.subr.bf16.mxu0 0
  %1674 = vmatpush1.bf16.msra.mxu0 %v1276
  %1675 = vmatprep.subr.bf16.mxu0 0
  %1676 = vmatpush1.bf16.msra.mxu0 %v1277
  %1677 = vmatprep.subr.bf16.mxu0 0
  %1678 = vmatpush1.bf16.msra.mxu0 %v1278
  %1679 = vmatprep.subr.bf16.mxu0 0
  %1680 = vmatpush1.bf16.msra.mxu0 %v1279
  %1681 = vmatprep.subr.bf16.mxu0 0
  %1682 = vmatpush1.bf16.msra.mxu0 %v1280
  %1683 = vmatprep.subr.bf16.mxu0 0
  %1684 = vmatpush1.bf16.msra.mxu0 %v1281
  %1685 = vmatprep.mubr.bf16.mxu0 %v714
  %1686 = vmatmul.mubr.bf16.gmra.mrb[0].mxu0 %v713
  %v1687 = vpop.f32.mrb[0].mxu0
  %v1688 = vadd.f32 %v1591, %v1687
  %v1689 = vpop.f32.mrb[0].mxu0
  %v1690 = vpop.f32.mrb[0].mxu0
  %v1691 = vadd.f32 %v1594, %v1690
  %v1692 = vpop.f32.mrb[0].mxu0
  %1693 = vmatprep.mubr.bf16.mxu0 %v723
  %1694 = vmatmul.mubr.bf16.gmra.mrb[0].mxu0 %v722
  %v1695 = vpop.f32.mrb[0].mxu0
  %v1696 = vadd.f32 %v1599, %v1695
  %v1697 = vpop.f32.mrb[0].mxu0
  %v1698 = vpop.f32.mrb[0].mxu0
  %v1699 = vadd.f32 %v1602, %v1698
  %v1700 = vpop.f32.mrb[0].mxu0
  %1701 = vmatprep.mubr.bf16.mxu0 %v732
  %1702 = vmatmul.mubr.bf16.gmra.mrb[0].mxu0 %v731
  %v1703 = vpop.f32.mrb[0].mxu0
  %v1704 = vadd.f32 %v1607, %v1703
  %v1705 = vpop.f32.mrb[0].mxu0
  %v1706 = vpop.f32.mrb[0].mxu0
  %v1707 = vadd.f32 %v1610, %v1706
  %v1708 = vpop.f32.mrb[0].mxu0
  %1709 = vmatprep.mubr.bf16.mxu0 %v741
  %1710 = vmatmul.mubr.bf16.gmra.mrb[0].mxu0 %v740
  %v1711 = vpop.f32.mrb[0].mxu0
  %v1712 = vadd.f32 %v1615, %v1711
  %v1713 = vpop.f32.mrb[0].mxu0
  %v1714 = vpop.f32.mrb[0].mxu0
  %v1715 = vadd.f32 %v1618, %v1714
  %v1716 = vpop.f32.mrb[0].mxu0
  %1717 = vmatprep.mubr.bf16.mxu0 %v750
  %1718 = vmatmul.mubr.bf16.gmra.mrb[0].mxu0 %v749
  %v1719 = vpop.f32.mrb[0].mxu0
  %v1720 = vadd.f32 %v1623, %v1719
  %v1721 = vpop.f32.mrb[0].mxu0
  %v1722 = vpop.f32.mrb[0].mxu0
  %v1723 = vadd.f32 %v1626, %v1722
  %v1724 = vpop.f32.mrb[0].mxu0
  %1725 = vmatprep.mubr.bf16.mxu0 %v759
  %1726 = vmatmul.mubr.bf16.gmra.mrb[0].mxu0 %v758
  %v1727 = vpop.f32.mrb[0].mxu0
  %v1728 = vadd.f32 %v1631, %v1727
  %v1729 = vpop.f32.mrb[0].mxu0
  %v1730 = vpop.f32.mrb[0].mxu0
  %v1731 = vadd.f32 %v1634, %v1730
  %v1732 = vpop.f32.mrb[0].mxu0
  %1733 = vmatprep.mubr.bf16.mxu0 %v768
  %1734 = vmatmul.mubr.bf16.gmra.mrb[0].mxu0 %v767
  %v1735 = vpop.f32.mrb[0].mxu0
  %v1736 = vadd.f32 %v1639, %v1735
  %v1737 = vpop.f32.mrb[0].mxu0
  %v1738 = vpop.f32.mrb[0].mxu0
  %v1739 = vadd.f32 %v1642, %v1738
  %v1740 = vpop.f32.mrb[0].mxu0
  %1741 = vmatprep.mubr.bf16.mxu0 %v777
  %1742 = vmatmul.mubr.bf16.gmra.mrb[0].mxu0 %v776
  %v1743 = vpop.f32.mrb[0].mxu0
  %v1744 = vadd.f32 %v1647, %v1743
  %v1745 = vpop.f32.mrb[0].mxu0
  %v1746 = vpop.f32.mrb[0].mxu0
  %v1747 = vadd.f32 %v1650, %v1746
  %v1748 = vpop.f32.mrb[0].mxu0
  %1749 = vdwg.mxu0
  %1750 = vmatprep.subr.bf16.mxu0 0
  %1751 = vmatpush1.bf16.msra.mxu0 %v1282
  %1752 = vmatprep.subr.bf16.mxu0 0
  %1753 = vmatpush1.bf16.msra.mxu0 %v1283
  %1754 = vmatprep.subr.bf16.mxu0 0
  %1755 = vmatpush1.bf16.msra.mxu0 %v1284
  %1756 = vmatprep.subr.bf16.mxu0 0
  %1757 = vmatpush1.bf16.msra.mxu0 %v1285
  %1758 = vmatprep.subr.bf16.mxu0 0
  %1759 = vmatpush1.bf16.msra.mxu0 %v1286
  %1760 = vmatprep.subr.bf16.mxu0 0
  %1761 = vmatpush1.bf16.msra.mxu0 %v1287
  %1762 = vmatprep.subr.bf16.mxu0 0
  %1763 = vmatpush1.bf16.msra.mxu0 %v1288
  %1764 = vmatprep.subr.bf16.mxu0 0
  %1765 = vmatpush1.bf16.msra.mxu0 %v1289
  %1766 = vmatprep.subr.bf16.mxu0 0
  %1767 = vmatpush1.bf16.msra.mxu0 0
  %1768 = vmatprep.subr.bf16.mxu0 0
  %1769 = vmatpush1.bf16.msra.mxu0 0
  %1770 = vmatprep.subr.bf16.mxu0 0
  %1771 = vmatpush1.bf16.msra.mxu0 0
  %1772 = vmatprep.subr.bf16.mxu0 0
  %1773 = vmatpush1.bf16.msra.mxu0 0
  %1774 = vmatprep.subr.bf16.mxu0 0
  %1775 = vmatpush1.bf16.msra.mxu0 0
  %1776 = vmatprep.subr.bf16.mxu0 0
  %1777 = vmatpush1.bf16.msra.mxu0 0
  %1778 = vmatprep.subr.bf16.mxu0 0
  %1779 = vmatpush1.bf16.msra.mxu0 0
  %1780 = vmatprep.subr.bf16.mxu0 0
  %1781 = vmatpush1.bf16.msra.mxu0 0
  %1782 = vmatprep.mubr.bf16.mxu0 0
  %1783 = vmatmul.mubr.bf16.gmra.mrb[0].mxu0 %v715
  %v1784 = vpop.f32.mrb[0].mxu0
  %v1785 = vadd.f32 %v1688, %v1784
  %v1786 = vpop.f32.mrb[0].mxu0
  %v1787 = vpop.f32.mrb[0].mxu0
  %v1788 = vadd.f32 %v1691, %v1787
  %v1789 = vpop.f32.mrb[0].mxu0
  %1790 = vmatprep.mubr.bf16.mxu0 0
  %1791 = vmatmul.mubr.bf16.gmra.mrb[0].mxu0 %v724
  %v1792 = vpop.f32.mrb[0].mxu0
  %v1793 = vadd.f32 %v1696, %v1792
  %v1794 = vpop.f32.mrb[0].mxu0
  %v1795 = vpop.f32.mrb[0].mxu0
  %v1796 = vadd.f32 %v1699, %v1795
  %v1797 = vpop.f32.mrb[0].mxu0
  %1798 = vmatprep.mubr.bf16.mxu0 0
  %1799 = vmatmul.mubr.bf16.gmra.mrb[0].mxu0 %v733
  %v1800 = vpop.f32.mrb[0].mxu0
  %v1801 = vadd.f32 %v1704, %v1800
  %v1802 = vpop.f32.mrb[0].mxu0
  %v1803 = vpop.f32.mrb[0].mxu0
  %v1804 = vadd.f32 %v1707, %v1803
  %v1805 = vpop.f32.mrb[0].mxu0
  %1806 = vmatprep.mubr.bf16.mxu0 0
  %1807 = vmatmul.mubr.bf16.gmra.mrb[0].mxu0 %v742
  %v1808 = vpop.f32.mrb[0].mxu0
  %v1809 = vadd.f32 %v1712, %v1808
  %v1810 = vpop.f32.mrb[0].mxu0
  %v1811 = vpop.f32.mrb[0].mxu0
  %v1812 = vadd.f32 %v1715, %v1811
  %v1813 = vpop.f32.mrb[0].mxu0
  %1814 = vmatprep.mubr.bf16.mxu0 0
  %1815 = vmatmul.mubr.bf16.gmra.mrb[0].mxu0 %v751
  %v1816 = vpop.f32.mrb[0].mxu0
  %v1817 = vadd.f32 %v1720, %v1816
  %v1818 = vpop.f32.mrb[0].mxu0
  %v1819 = vpop.f32.mrb[0].mxu0
  %v1820 = vadd.f32 %v1723, %v1819
  %v1821 = vpop.f32.mrb[0].mxu0
  %1822 = vmatprep.mubr.bf16.mxu0 0
  %1823 = vmatmul.mubr.bf16.gmra.mrb[0].mxu0 %v760
  %v1824 = vpop.f32.mrb[0].mxu0
  %v1825 = vadd.f32 %v1728, %v1824
  %v1826 = vpop.f32.mrb[0].mxu0
  %v1827 = vpop.f32.mrb[0].mxu0
  %v1828 = vadd.f32 %v1731, %v1827
  %v1829 = vpop.f32.mrb[0].mxu0
  %1830 = vmatprep.mubr.bf16.mxu0 0
  %1831 = vmatmul.mubr.bf16.gmra.mrb[0].mxu0 %v769
  %v1832 = vpop.f32.mrb[0].mxu0
  %v1833 = vadd.f32 %v1736, %v1832
  %v1834 = vpop.f32.mrb[0].mxu0
  %v1835 = vpop.f32.mrb[0].mxu0
  %v1836 = vadd.f32 %v1739, %v1835
  %v1837 = vpop.f32.mrb[0].mxu0
  %1838 = vmatprep.mubr.bf16.mxu0 0
  %1839 = vmatmul.mubr.bf16.gmra.mrb[0].mxu0 %v778
  %v1840 = vpop.f32.mrb[0].mxu0
  %v1841 = vadd.f32 %v1744, %v1840
  %v1842 = vpop.f32.mrb[0].mxu0
  %v1843 = vpop.f32.mrb[0].mxu0
  %v1844 = vadd.f32 %v1747, %v1843
  %v1845 = vpop.f32.mrb[0].mxu0
  %1846 = vdwg.mxu0
  %vm1847 = vcmp.gt.f32.partialorder %v1785, 0.0
  %vm1848 = vcmp.gt.f32.partialorder %v1788, 0.0
  %vm1849 = vcmp.gt.f32.partialorder %v1793, 0.0
  %vm1850 = vcmp.gt.f32.partialorder %v1796, 0.0
  %vm1851 = vcmp.gt.f32.partialorder %v1801, 0.0
  %vm1852 = vcmp.gt.f32.partialorder %v1804, 0.0
  %vm1853 = vcmp.gt.f32.partialorder %v1809, 0.0
  %vm1854 = vcmp.gt.f32.partialorder %v1812, 0.0
  %vm1855 = vcmp.gt.f32.partialorder %v1817, 0.0
  %vm1856 = vcmp.gt.f32.partialorder %v1820, 0.0
  %vm1857 = vcmp.gt.f32.partialorder %v1825, 0.0
  %vm1858 = vcmp.gt.f32.partialorder %v1828, 0.0
  %vm1859 = vcmp.gt.f32.partialorder %v1833, 0.0
  %vm1860 = vcmp.gt.f32.partialorder %v1836, 0.0
  %vm1861 = vcmp.gt.f32.partialorder %v1841, 0.0
  %vm1862 = vcmp.gt.f32.partialorder %v1844, 0.0
  %v1863 = vmul.f32 %v1785, 0.01
  %v1864 = vmul.f32 %v1788, 0.01
  %v1865 = vmul.f32 %v1793, 0.01
  %v1866 = vmul.f32 %v1796, 0.01
  %v1867 = vmul.f32 %v1801, 0.01
  %v1868 = vmul.f32 %v1804, 0.01
  %v1869 = vmul.f32 %v1809, 0.01
  %v1870 = vmul.f32 %v1812, 0.01
  %v1871 = vmul.f32 %v1817, 0.01
  %v1872 = vmul.f32 %v1820, 0.01
  %v1873 = vmul.f32 %v1825, 0.01
  %v1874 = vmul.f32 %v1828, 0.01
  %v1875 = vmul.f32 %v1833, 0.01
  %v1876 = vmul.f32 %v1836, 0.01
  %v1877 = vmul.f32 %v1841, 0.01
  %v1878 = vmul.f32 %v1844, 0.01
  %v1879 = vsel %vm1847, %v1785, %v1863
  %v1880 = vsel %vm1848, %v1788, %v1864
  %v1881 = vsel %vm1849, %v1793, %v1865
  %v1882 = vsel %vm1850, %v1796, %v1866
  %v1883 = vsel %vm1851, %v1801, %v1867
  %v1884 = vsel %vm1852, %v1804, %v1868
  %v1885 = vsel %vm1853, %v1809, %v1869
  %v1886 = vsel %vm1854, %v1812, %v1870
  %v1887 = vsel %vm1855, %v1817, %v1871
  %v1888 = vsel %vm1856, %v1820, %v1872
  %v1889 = vsel %vm1857, %v1825, %v1873
  %v1890 = vsel %vm1858, %v1828, %v1874
  %v1891 = vsel %vm1859, %v1833, %v1875
  %v1892 = vsel %vm1860, %v1836, %v1876
  %v1893 = vsel %vm1861, %v1841, %v1877
  %v1894 = vsel %vm1862, %v1844, %v1878
  %v1895 = vpack.c.bf16 %v1880, %v1879
  %v1896 = vpack.c.bf16 %v1882, %v1881
  %v1897 = vpack.c.bf16 %v1884, %v1883
  %v1898 = vpack.c.bf16 %v1886, %v1885
  %v1899 = vpack.c.bf16 %v1888, %v1887
  %v1900 = vpack.c.bf16 %v1890, %v1889
  %v1901 = vpack.c.bf16 %v1892, %v1891
  %v1902 = vpack.c.bf16 %v1894, %v1893
  %v1903 = vld [vmem:[%s3] sm:$0xf]
  %v1904 = vld [vmem:[%s3 + $0x4] sm:$0xf]
  %v1905 = vld [vmem:[%s3 + $0x8] sm:$0xf]
  %v1906 = vld [vmem:[%s3 + $0xc] sm:$0xf]
  %v1907 = vld [vmem:[%s3 + $0x10] sm:$0xf]
  %v1908 = vld [vmem:[%s3 + $0x14] sm:$0xf]
  %v1909 = vld [vmem:[%s3 + $0x18] sm:$0xf]
  %v1910 = vld [vmem:[%s3 + $0x1c] sm:$0xf]
  %v1911 = vld [vmem:[%s3 + $0x20] sm:$0xf]
  %v1912 = vld [vmem:[%s3 + $0x24] sm:$0xf]
  %v1913 = vld [vmem:[%s3 + $0x28] sm:$0xf]
  %v1914 = vld [vmem:[%s3 + $0x2c] sm:$0xf]
  %v1915 = vld [vmem:[%s3 + $0x30] sm:$0xf]
  %v1916 = vld [vmem:[%s3 + $0x34] sm:$0xf]
  %v1917 = vld [vmem:[%s3 + $0x38] sm:$0xf]
  %v1918 = vld [vmem:[%s3 + $0x3c] sm:$0xf]
  %v1919 = vld [vmem:[%s4] sm:$0x1]
  %v1921 = vlaneseq
  %v1922 = vshrl.u32 %v1921, 7
  %v1923 = vsub.s32 0, %v1922
  %v1924 = vrot.slane %v1919, %v1923
  %v1942 = vunpack.c.l.b16 %v1903
  %v1943 = vunpack.c.l.b16 %v1904
  %v1944 = vunpack.c.l.b16 %v1905
  %v1945 = vunpack.c.l.b16 %v1906
  %v1946 = vunpack.c.l.b16 %v1907
  %v1947 = vunpack.c.l.b16 %v1908
  %v1948 = vunpack.c.l.b16 %v1909
  %v1949 = vunpack.c.l.b16 %v1910
  %v1950 = vunpack.c.l.b16 %v1911
  %v1951 = vunpack.c.l.b16 %v1912
  %v1952 = vunpack.c.l.b16 %v1913
  %v1953 = vunpack.c.l.b16 %v1914
  %v1954 = vunpack.c.l.b16 %v1915
  %v1955 = vunpack.c.l.b16 %v1916
  %v1956 = vunpack.c.l.b16 %v1917
  %v1957 = vunpack.c.l.b16 %v1918
  %v1958 = vpack.c.b16 %v1943, %v1942
  %v1959 = vpack.c.b16 %v1945, %v1944
  %v1960 = vpack.c.b16 %v1947, %v1946
  %v1961 = vpack.c.b16 %v1949, %v1948
  %v1962 = vpack.c.b16 %v1951, %v1950
  %v1963 = vpack.c.b16 %v1953, %v1952
  %v1964 = vpack.c.b16 %v1955, %v1954
  %v1965 = vpack.c.b16 %v1957, %v1956
  %1974 = vmatprep.subr.bf16.mxu0 0
  %1975 = vmatpush1.bf16.msra.mxu0 %v1958
  %1976 = vmatprep.subr.bf16.mxu0 0
  %1977 = vmatpush1.bf16.msra.mxu0 %v1959
  %1978 = vmatprep.subr.bf16.mxu0 0
  %1979 = vmatpush1.bf16.msra.mxu0 %v1960
  %1980 = vmatprep.subr.bf16.mxu0 0
  %1981 = vmatpush1.bf16.msra.mxu0 %v1961
  %1982 = vmatprep.subr.bf16.mxu0 0
  %1983 = vmatpush1.bf16.msra.mxu0 %v1962
  %1984 = vmatprep.subr.bf16.mxu0 0
  %1985 = vmatpush1.bf16.msra.mxu0 %v1963
  %1986 = vmatprep.subr.bf16.mxu0 0
  %1987 = vmatpush1.bf16.msra.mxu0 %v1964
  %1988 = vmatprep.subr.bf16.mxu0 0
  %1989 = vmatpush1.bf16.msra.mxu0 %v1965
  %1990 = vmatprep.subr.bf16.mxu0 0
  %1991 = vmatpush1.bf16.msra.mxu0 0
  %1992 = vmatprep.subr.bf16.mxu0 0
  %1993 = vmatpush1.bf16.msra.mxu0 0
  %1994 = vmatprep.subr.bf16.mxu0 0
  %1995 = vmatpush1.bf16.msra.mxu0 0
  %1996 = vmatprep.subr.bf16.mxu0 0
  %1997 = vmatpush1.bf16.msra.mxu0 0
  %1998 = vmatprep.subr.bf16.mxu0 0
  %1999 = vmatpush1.bf16.msra.mxu0 0
  %2000 = vmatprep.subr.bf16.mxu0 0
  %2001 = vmatpush1.bf16.msra.mxu0 0
  %2002 = vmatprep.subr.bf16.mxu0 0
  %2003 = vmatpush1.bf16.msra.mxu0 0
  %2004 = vmatprep.subr.bf16.mxu0 0
  %2005 = vmatpush1.bf16.msra.mxu0 0
  %2006 = vmatprep.mubr.bf16.mxu0 0
  %2007 = vmatmul.mubr.bf16.gmra.mrb[0].mxu0 %v1895
  %v2008 = vpop.f32.mrb[0].mxu0
  %v2009 = vadd.f32 %v1924, %v2008
  %v2010 = vpop.f32.mrb[0].mxu0
  %v2011 = vpop.f32.mrb[0].mxu0
  %v2012 = vadd.f32 %v1924, %v2011
  %v2013 = vpop.f32.mrb[0].mxu0
  %2014 = vmatprep.mubr.bf16.mxu0 0
  %2015 = vmatmul.mubr.bf16.gmra.mrb[0].mxu0 %v1896
  %v2016 = vpop.f32.mrb[0].mxu0
  %v2017 = vadd.f32 %v1924, %v2016
  %v2018 = vpop.f32.mrb[0].mxu0
  %v2019 = vpop.f32.mrb[0].mxu0
  %v2020 = vadd.f32 %v1924, %v2019
  %v2021 = vpop.f32.mrb[0].mxu0
  %2022 = vmatprep.mubr.bf16.mxu0 0
  %2023 = vmatmul.mubr.bf16.gmra.mrb[0].mxu0 %v1897
  %v2024 = vpop.f32.mrb[0].mxu0
  %v2025 = vadd.f32 %v1924, %v2024
  %v2026 = vpop.f32.mrb[0].mxu0
  %v2027 = vpop.f32.mrb[0].mxu0
  %v2028 = vadd.f32 %v1924, %v2027
  %v2029 = vpop.f32.mrb[0].mxu0
  %2030 = vmatprep.mubr.bf16.mxu0 0
  %2031 = vmatmul.mubr.bf16.gmra.mrb[0].mxu0 %v1898
  %v2032 = vpop.f32.mrb[0].mxu0
  %v2033 = vadd.f32 %v1924, %v2032
  %v2034 = vpop.f32.mrb[0].mxu0
  %v2035 = vpop.f32.mrb[0].mxu0
  %v2036 = vadd.f32 %v1924, %v2035
  %v2037 = vpop.f32.mrb[0].mxu0
  %2038 = vmatprep.mubr.bf16.mxu0 0
  %2039 = vmatmul.mubr.bf16.gmra.mrb[0].mxu0 %v1899
  %v2040 = vpop.f32.mrb[0].mxu0
  %v2041 = vadd.f32 %v1924, %v2040
  %v2042 = vpop.f32.mrb[0].mxu0
  %v2043 = vpop.f32.mrb[0].mxu0
  %v2044 = vadd.f32 %v1924, %v2043
  %v2045 = vpop.f32.mrb[0].mxu0
  %2046 = vmatprep.mubr.bf16.mxu0 0
  %2047 = vmatmul.mubr.bf16.gmra.mrb[0].mxu0 %v1900
  %v2048 = vpop.f32.mrb[0].mxu0
  %v2049 = vadd.f32 %v1924, %v2048
  %v2050 = vpop.f32.mrb[0].mxu0
  %v2051 = vpop.f32.mrb[0].mxu0
  %v2052 = vadd.f32 %v1924, %v2051
  %v2053 = vpop.f32.mrb[0].mxu0
  %2054 = vmatprep.mubr.bf16.mxu0 0
  %2055 = vmatmul.mubr.bf16.gmra.mrb[0].mxu0 %v1901
  %v2056 = vpop.f32.mrb[0].mxu0
  %v2057 = vadd.f32 %v1924, %v2056
  %v2058 = vpop.f32.mrb[0].mxu0
  %v2059 = vpop.f32.mrb[0].mxu0
  %v2060 = vadd.f32 %v1924, %v2059
  %v2061 = vpop.f32.mrb[0].mxu0
  %2062 = vmatprep.mubr.bf16.mxu0 0
  %2063 = vmatmul.mubr.bf16.gmra.mrb[0].mxu0 %v1902
  %v2064 = vpop.f32.mrb[0].mxu0
  %v2065 = vadd.f32 %v1924, %v2064
  %v2066 = vpop.f32.mrb[0].mxu0
  %v2067 = vpop.f32.mrb[0].mxu0
  %v2068 = vadd.f32 %v1924, %v2067
  %v2069 = vpop.f32.mrb[0].mxu0
  %2070 = vdwg.mxu0
  %2087 = vrot.lane.b32.xlu0 %v2009, 119
  %v2088 = vpop.permute.xlu0 %2087
  %2089 = vrot.lane.b32.xlu0 %v2012, 119
  %v2090 = vpop.permute.xlu0 %2089
  %2091 = vrot.lane.b32.xlu0 %v2017, 119
  %v2092 = vpop.permute.xlu0 %2091
  %2093 = vrot.lane.b32.xlu0 %v2020, 119
  %v2094 = vpop.permute.xlu0 %2093
  %2095 = vrot.lane.b32.xlu0 %v2025, 119
  %v2096 = vpop.permute.xlu0 %2095
  %2097 = vrot.lane.b32.xlu0 %v2028, 119
  %v2098 = vpop.permute.xlu0 %2097
  %2099 = vrot.lane.b32.xlu0 %v2033, 119
  %v2100 = vpop.permute.xlu0 %2099
  %2101 = vrot.lane.b32.xlu0 %v2036, 119
  %v2102 = vpop.permute.xlu0 %2101
  %2103 = vrot.lane.b32.xlu0 %v2041, 119
  %v2104 = vpop.permute.xlu0 %2103
  %2105 = vrot.lane.b32.xlu0 %v2044, 119
  %v2106 = vpop.permute.xlu0 %2105
  %2107 = vrot.lane.b32.xlu0 %v2049, 119
  %v2108 = vpop.permute.xlu0 %2107
  %2109 = vrot.lane.b32.xlu0 %v2052, 119
  %v2110 = vpop.permute.xlu0 %2109
  %2111 = vrot.lane.b32.xlu0 %v2057, 119
  %v2112 = vpop.permute.xlu0 %2111
  %2113 = vrot.lane.b32.xlu0 %v2060, 119
  %v2114 = vpop.permute.xlu0 %2113
  %2115 = vrot.lane.b32.xlu0 %v2065, 119
  %v2116 = vpop.permute.xlu0 %2115
  %2117 = vrot.lane.b32.xlu0 %v2068, 119
  %v2118 = vpop.permute.xlu0 %2117
  %v2135 = vmax.f32 %v2009, %v2088
  %v2136 = vmax.f32 %v2012, %v2090
  %v2137 = vmax.f32 %v2017, %v2092
  %v2138 = vmax.f32 %v2020, %v2094
  %v2139 = vmax.f32 %v2025, %v2096
  %v2140 = vmax.f32 %v2028, %v2098
  %v2141 = vmax.f32 %v2033, %v2100
  %v2142 = vmax.f32 %v2036, %v2102
  %v2143 = vmax.f32 %v2041, %v2104
  %v2144 = vmax.f32 %v2044, %v2106
  %v2145 = vmax.f32 %v2049, %v2108
  %v2146 = vmax.f32 %v2052, %v2110
  %v2147 = vmax.f32 %v2057, %v2112
  %v2148 = vmax.f32 %v2060, %v2114
  %v2149 = vmax.f32 %v2065, %v2116
  %v2150 = vmax.f32 %v2068, %v2118
  %v2151 = vsub.f32 %v2009, %v2135
  %v2152 = vsub.f32 %v2012, %v2136
  %v2153 = vsub.f32 %v2017, %v2137
  %v2154 = vsub.f32 %v2020, %v2138
  %v2155 = vsub.f32 %v2025, %v2139
  %v2156 = vsub.f32 %v2028, %v2140
  %v2157 = vsub.f32 %v2033, %v2141
  %v2158 = vsub.f32 %v2036, %v2142
  %v2159 = vsub.f32 %v2041, %v2143
  %v2160 = vsub.f32 %v2044, %v2144
  %v2161 = vsub.f32 %v2049, %v2145
  %v2162 = vsub.f32 %v2052, %v2146
  %v2163 = vsub.f32 %v2057, %v2147
  %v2164 = vsub.f32 %v2060, %v2148
  %v2165 = vsub.f32 %v2065, %v2149
  %v2166 = vsub.f32 %v2068, %v2150
  %v2167 = vmul.f32 %v2151, 1.442695
  %v2168 = vpow.pop %v2167
  %v2169 = vmul.f32 %v2152, 1.442695
  %v2170 = vpow.pop %v2169
  %v2171 = vmul.f32 %v2153, 1.442695
  %v2172 = vpow.pop %v2171
  %v2173 = vmul.f32 %v2154, 1.442695
  %v2174 = vpow.pop %v2173
  %v2175 = vmul.f32 %v2155, 1.442695
  %v2176 = vpow.pop %v2175
  %v2177 = vmul.f32 %v2156, 1.442695
  %v2178 = vpow.pop %v2177
  %v2179 = vmul.f32 %v2157, 1.442695
  %v2180 = vpow.pop %v2179
  %v2181 = vmul.f32 %v2158, 1.442695
  %v2182 = vpow.pop %v2181
  %v2183 = vmul.f32 %v2159, 1.442695
  %v2184 = vpow.pop %v2183
  %v2185 = vmul.f32 %v2160, 1.442695
  %v2186 = vpow.pop %v2185
  %v2187 = vmul.f32 %v2161, 1.442695
  %v2188 = vpow.pop %v2187
  %v2189 = vmul.f32 %v2162, 1.442695
  %v2190 = vpow.pop %v2189
  %v2191 = vmul.f32 %v2163, 1.442695
  %v2192 = vpow.pop %v2191
  %v2193 = vmul.f32 %v2164, 1.442695
  %v2194 = vpow.pop %v2193
  %v2195 = vmul.f32 %v2165, 1.442695
  %v2196 = vpow.pop %v2195
  %v2197 = vmul.f32 %v2166, 1.442695
  %v2198 = vpow.pop %v2197
  %2215 = vrot.lane.b32.xlu0 %v2135, 9
  %v2216 = vpop.permute.xlu0 %2215
  %2217 = vrot.lane.b32.xlu0 %v2136, 9
  %v2218 = vpop.permute.xlu0 %2217
  %2219 = vrot.lane.b32.xlu0 %v2137, 9
  %v2220 = vpop.permute.xlu0 %2219
  %2221 = vrot.lane.b32.xlu0 %v2138, 9
  %v2222 = vpop.permute.xlu0 %2221
  %2223 = vrot.lane.b32.xlu0 %v2139, 9
  %v2224 = vpop.permute.xlu0 %2223
  %2225 = vrot.lane.b32.xlu0 %v2140, 9
  %v2226 = vpop.permute.xlu0 %2225
  %2227 = vrot.lane.b32.xlu0 %v2141, 9
  %v2228 = vpop.permute.xlu0 %2227
  %2229 = vrot.lane.b32.xlu0 %v2142, 9
  %v2230 = vpop.permute.xlu0 %2229
  %2231 = vrot.lane.b32.xlu0 %v2143, 9
  %v2232 = vpop.permute.xlu0 %2231
  %2233 = vrot.lane.b32.xlu0 %v2144, 9
  %v2234 = vpop.permute.xlu0 %2233
  %2235 = vrot.lane.b32.xlu0 %v2145, 9
  %v2236 = vpop.permute.xlu0 %2235
  %2237 = vrot.lane.b32.xlu0 %v2146, 9
  %v2238 = vpop.permute.xlu0 %2237
  %2239 = vrot.lane.b32.xlu0 %v2147, 9
  %v2240 = vpop.permute.xlu0 %2239
  %2241 = vrot.lane.b32.xlu0 %v2148, 9
  %v2242 = vpop.permute.xlu0 %2241
  %2243 = vrot.lane.b32.xlu0 %v2149, 9
  %v2244 = vpop.permute.xlu0 %2243
  %2245 = vrot.lane.b32.xlu0 %v2150, 9
  %v2246 = vpop.permute.xlu0 %2245
  %v2263 = vsub.f32 %v2009, %v2216
  %v2264 = vsub.f32 %v2012, %v2218
  %v2265 = vsub.f32 %v2017, %v2220
  %v2266 = vsub.f32 %v2020, %v2222
  %v2267 = vsub.f32 %v2025, %v2224
  %v2268 = vsub.f32 %v2028, %v2226
  %v2269 = vsub.f32 %v2033, %v2228
  %v2270 = vsub.f32 %v2036, %v2230
  %v2271 = vsub.f32 %v2041, %v2232
  %v2272 = vsub.f32 %v2044, %v2234
  %v2273 = vsub.f32 %v2049, %v2236
  %v2274 = vsub.f32 %v2052, %v2238
  %v2275 = vsub.f32 %v2057, %v2240
  %v2276 = vsub.f32 %v2060, %v2242
  %v2277 = vsub.f32 %v2065, %v2244
  %v2278 = vsub.f32 %v2068, %v2246
  %v2279 = vmul.f32 %v2263, 1.442695
  %v2280 = vpow.pop %v2279
  %v2281 = vmul.f32 %v2264, 1.442695
  %v2282 = vpow.pop %v2281
  %v2283 = vmul.f32 %v2265, 1.442695
  %v2284 = vpow.pop %v2283
  %v2285 = vmul.f32 %v2266, 1.442695
  %v2286 = vpow.pop %v2285
  %v2287 = vmul.f32 %v2267, 1.442695
  %v2288 = vpow.pop %v2287
  %v2289 = vmul.f32 %v2268, 1.442695
  %v2290 = vpow.pop %v2289
  %v2291 = vmul.f32 %v2269, 1.442695
  %v2292 = vpow.pop %v2291
  %v2293 = vmul.f32 %v2270, 1.442695
  %v2294 = vpow.pop %v2293
  %v2295 = vmul.f32 %v2271, 1.442695
  %v2296 = vpow.pop %v2295
  %v2297 = vmul.f32 %v2272, 1.442695
  %v2298 = vpow.pop %v2297
  %v2299 = vmul.f32 %v2273, 1.442695
  %v2300 = vpow.pop %v2299
  %v2301 = vmul.f32 %v2274, 1.442695
  %v2302 = vpow.pop %v2301
  %v2303 = vmul.f32 %v2275, 1.442695
  %v2304 = vpow.pop %v2303
  %v2305 = vmul.f32 %v2276, 1.442695
  %v2306 = vpow.pop %v2305
  %v2307 = vmul.f32 %v2277, 1.442695
  %v2308 = vpow.pop %v2307
  %v2309 = vmul.f32 %v2278, 1.442695
  %v2310 = vpow.pop %v2309
  %2327 = vrot.lane.b32.xlu0 %v2280, 119
  %v2328 = vpop.permute.xlu0 %2327
  %2329 = vrot.lane.b32.xlu0 %v2282, 119
  %v2330 = vpop.permute.xlu0 %2329
  %2331 = vrot.lane.b32.xlu0 %v2284, 119
  %v2332 = vpop.permute.xlu0 %2331
  %2333 = vrot.lane.b32.xlu0 %v2286, 119
  %v2334 = vpop.permute.xlu0 %2333
  %2335 = vrot.lane.b32.xlu0 %v2288, 119
  %v2336 = vpop.permute.xlu0 %2335
  %2337 = vrot.lane.b32.xlu0 %v2290, 119
  %v2338 = vpop.permute.xlu0 %2337
  %2339 = vrot.lane.b32.xlu0 %v2292, 119
  %v2340 = vpop.permute.xlu0 %2339
  %2341 = vrot.lane.b32.xlu0 %v2294, 119
  %v2342 = vpop.permute.xlu0 %2341
  %2343 = vrot.lane.b32.xlu0 %v2296, 119
  %v2344 = vpop.permute.xlu0 %2343
  %2345 = vrot.lane.b32.xlu0 %v2298, 119
  %v2346 = vpop.permute.xlu0 %2345
  %2347 = vrot.lane.b32.xlu0 %v2300, 119
  %v2348 = vpop.permute.xlu0 %2347
  %2349 = vrot.lane.b32.xlu0 %v2302, 119
  %v2350 = vpop.permute.xlu0 %2349
  %2351 = vrot.lane.b32.xlu0 %v2304, 119
  %v2352 = vpop.permute.xlu0 %2351
  %2353 = vrot.lane.b32.xlu0 %v2306, 119
  %v2354 = vpop.permute.xlu0 %2353
  %2355 = vrot.lane.b32.xlu0 %v2308, 119
  %v2356 = vpop.permute.xlu0 %2355
  %2357 = vrot.lane.b32.xlu0 %v2310, 119
  %v2358 = vpop.permute.xlu0 %2357
  %v2375 = vadd.f32 %v2168, %v2328
  %v2376 = vadd.f32 %v2170, %v2330
  %v2377 = vadd.f32 %v2172, %v2332
  %v2378 = vadd.f32 %v2174, %v2334
  %v2379 = vadd.f32 %v2176, %v2336
  %v2380 = vadd.f32 %v2178, %v2338
  %v2381 = vadd.f32 %v2180, %v2340
  %v2382 = vadd.f32 %v2182, %v2342
  %v2383 = vadd.f32 %v2184, %v2344
  %v2384 = vadd.f32 %v2186, %v2346
  %v2385 = vadd.f32 %v2188, %v2348
  %v2386 = vadd.f32 %v2190, %v2350
  %v2387 = vadd.f32 %v2192, %v2352
  %v2388 = vadd.f32 %v2194, %v2354
  %v2389 = vadd.f32 %v2196, %v2356
  %v2390 = vadd.f32 %v2198, %v2358
  %v2391 = vrcp.pop %v2375
  %v2392 = vrcp.pop %v2376
  %v2393 = vrcp.pop %v2377
  %v2394 = vrcp.pop %v2378
  %v2395 = vrcp.pop %v2379
  %v2396 = vrcp.pop %v2380
  %v2397 = vrcp.pop %v2381
  %v2398 = vrcp.pop %v2382
  %v2399 = vrcp.pop %v2383
  %v2400 = vrcp.pop %v2384
  %v2401 = vrcp.pop %v2385
  %v2402 = vrcp.pop %v2386
  %v2403 = vrcp.pop %v2387
  %v2404 = vrcp.pop %v2388
  %v2405 = vrcp.pop %v2389
  %v2406 = vrcp.pop %v2390
  %v2407 = vmul.f32 %v2168, %v2391
  %v2408 = vmul.f32 %v2170, %v2392
  %v2409 = vmul.f32 %v2172, %v2393
  %v2410 = vmul.f32 %v2174, %v2394
  %v2411 = vmul.f32 %v2176, %v2395
  %v2412 = vmul.f32 %v2178, %v2396
  %v2413 = vmul.f32 %v2180, %v2397
  %v2414 = vmul.f32 %v2182, %v2398
  %v2415 = vmul.f32 %v2184, %v2399
  %v2416 = vmul.f32 %v2186, %v2400
  %v2417 = vmul.f32 %v2188, %v2401
  %v2418 = vmul.f32 %v2190, %v2402
  %v2419 = vmul.f32 %v2192, %v2403
  %v2420 = vmul.f32 %v2194, %v2404
  %v2421 = vmul.f32 %v2196, %v2405
  %v2422 = vmul.f32 %v2198, %v2406
  %2439 = vrot.lane.b32.xlu0 %v2391, 9
  %v2440 = vpop.permute.xlu0 %2439
  %2441 = vrot.lane.b32.xlu0 %v2392, 9
  %v2442 = vpop.permute.xlu0 %2441
  %2443 = vrot.lane.b32.xlu0 %v2393, 9
  %v2444 = vpop.permute.xlu0 %2443
  %2445 = vrot.lane.b32.xlu0 %v2394, 9
  %v2446 = vpop.permute.xlu0 %2445
  %2447 = vrot.lane.b32.xlu0 %v2395, 9
  %v2448 = vpop.permute.xlu0 %2447
  %2449 = vrot.lane.b32.xlu0 %v2396, 9
  %v2450 = vpop.permute.xlu0 %2449
  %2451 = vrot.lane.b32.xlu0 %v2397, 9
  %v2452 = vpop.permute.xlu0 %2451
  %2453 = vrot.lane.b32.xlu0 %v2398, 9
  %v2454 = vpop.permute.xlu0 %2453
  %2455 = vrot.lane.b32.xlu0 %v2399, 9
  %v2456 = vpop.permute.xlu0 %2455
  %2457 = vrot.lane.b32.xlu0 %v2400, 9
  %v2458 = vpop.permute.xlu0 %2457
  %2459 = vrot.lane.b32.xlu0 %v2401, 9
  %v2460 = vpop.permute.xlu0 %2459
  %2461 = vrot.lane.b32.xlu0 %v2402, 9
  %v2462 = vpop.permute.xlu0 %2461
  %2463 = vrot.lane.b32.xlu0 %v2403, 9
  %v2464 = vpop.permute.xlu0 %2463
  %2465 = vrot.lane.b32.xlu0 %v2404, 9
  %v2466 = vpop.permute.xlu0 %2465
  %2467 = vrot.lane.b32.xlu0 %v2405, 9
  %v2468 = vpop.permute.xlu0 %2467
  %2469 = vrot.lane.b32.xlu0 %v2406, 9
  %v2470 = vpop.permute.xlu0 %2469
  %v2487 = vmul.f32 %v2280, %v2440
  %v2488 = vmul.f32 %v2282, %v2442
  %v2489 = vmul.f32 %v2284, %v2444
  %v2490 = vmul.f32 %v2286, %v2446
  %v2491 = vmul.f32 %v2288, %v2448
  %v2492 = vmul.f32 %v2290, %v2450
  %v2493 = vmul.f32 %v2292, %v2452
  %v2494 = vmul.f32 %v2294, %v2454
  %v2495 = vmul.f32 %v2296, %v2456
  %v2496 = vmul.f32 %v2298, %v2458
  %v2497 = vmul.f32 %v2300, %v2460
  %v2498 = vmul.f32 %v2302, %v2462
  %v2499 = vmul.f32 %v2304, %v2464
  %v2500 = vmul.f32 %v2306, %v2466
  %v2501 = vmul.f32 %v2308, %v2468
  %v2502 = vmul.f32 %v2310, %v2470
  %vm2503 = vcmask 293888
  %v2504 = vsel %vm2503, %v2009, %v2407
  %v2505 = vsel %vm2503, %v2012, %v2408
  %v2506 = vsel %vm2503, %v2017, %v2409
  %v2507 = vsel %vm2503, %v2020, %v2410
  %v2508 = vsel %vm2503, %v2025, %v2411
  %v2509 = vsel %vm2503, %v2028, %v2412
  %v2510 = vsel %vm2503, %v2033, %v2413
  %v2511 = vsel %vm2503, %v2036, %v2414
  %v2512 = vsel %vm2503, %v2041, %v2415
  %v2513 = vsel %vm2503, %v2044, %v2416
  %v2514 = vsel %vm2503, %v2049, %v2417
  %v2515 = vsel %vm2503, %v2052, %v2418
  %v2516 = vsel %vm2503, %v2057, %v2419
  %v2517 = vsel %vm2503, %v2060, %v2420
  %v2518 = vsel %vm2503, %v2065, %v2421
  %v2519 = vsel %vm2503, %v2068, %v2422
  %vm2520 = vcmask 367616
  %v2521 = vsel %vm2520, %v2504, %v2487
  %v2522 = vsel %vm2520, %v2505, %v2488
  %v2523 = vsel %vm2520, %v2506, %v2489
  %v2524 = vsel %vm2520, %v2507, %v2490
  %v2525 = vsel %vm2520, %v2508, %v2491
  %v2526 = vsel %vm2520, %v2509, %v2492
  %v2527 = vsel %vm2520, %v2510, %v2493
  %v2528 = vsel %vm2520, %v2511, %v2494
  %v2529 = vsel %vm2520, %v2512, %v2495
  %v2530 = vsel %vm2520, %v2513, %v2496
  %v2531 = vsel %vm2520, %v2514, %v2497
  %v2532 = vsel %vm2520, %v2515, %v2498
  %v2533 = vsel %vm2520, %v2516, %v2499
  %v2534 = vsel %vm2520, %v2517, %v2500
  %v2535 = vsel %vm2520, %v2518, %v2501
  %v2536 = vsel %vm2520, %v2519, %v2502
  %vm2537 = vcmask 441344
  %v2538 = vsel %vm2537, %v2521, %v2009
  %v2539 = vsel %vm2537, %v2522, %v2012
  %v2540 = vsel %vm2537, %v2523, %v2017
  %v2541 = vsel %vm2537, %v2524, %v2020
  %v2542 = vsel %vm2537, %v2525, %v2025
  %v2543 = vsel %vm2537, %v2526, %v2028
  %v2544 = vsel %vm2537, %v2527, %v2033
  %v2545 = vsel %vm2537, %v2528, %v2036
  %v2546 = vsel %vm2537, %v2529, %v2041
  %v2547 = vsel %vm2537, %v2530, %v2044
  %v2548 = vsel %vm2537, %v2531, %v2049
  %v2549 = vsel %vm2537, %v2532, %v2052
  %v2550 = vsel %vm2537, %v2533, %v2057
  %v2551 = vsel %vm2537, %v2534, %v2060
  %v2552 = vsel %vm2537, %v2535, %v2065
  %v2553 = vsel %vm2537, %v2536, %v2068
  %2554 = vst [vmem:[%s5] sm:$0xff] %v2538
  %2555 = vst [vmem:[%s5 + $0x8] sm:$0xff] %v2539
  %2556 = vst [vmem:[%s5 + $0x10] sm:$0xff] %v2540
  %2557 = vst [vmem:[%s5 + $0x18] sm:$0xff] %v2541
  %2558 = vst [vmem:[%s5 + $0x20] sm:$0xff] %v2542
  %2559 = vst [vmem:[%s5 + $0x28] sm:$0xff] %v2543
  %2560 = vst [vmem:[%s5 + $0x30] sm:$0xff] %v2544
  %2561 = vst [vmem:[%s5 + $0x38] sm:$0xff] %v2545
  %2562 = vst [vmem:[%s5 + $0x40] sm:$0xff] %v2546
  %2563 = vst [vmem:[%s5 + $0x48] sm:$0xff] %v2547
  %2564 = vst [vmem:[%s5 + $0x50] sm:$0xff] %v2548
  %2565 = vst [vmem:[%s5 + $0x58] sm:$0xff] %v2549
  %2566 = vst [vmem:[%s5 + $0x60] sm:$0xff] %v2550
  %2567 = vst [vmem:[%s5 + $0x68] sm:$0xff] %v2551
  %2568 = vst [vmem:[%s5 + $0x70] sm:$0xff] %v2552
  %2569 = vst [vmem:[%s5 + $0x78] sm:$0xff] %v2553
  // Predicated region
  $region22: #{rpn_forward_net.1} parent=0 // pred_check
    _
  $region23: #{rpn_forward_net.1} parent=0 // pred_check_branch
    %2571 = sbr.rel (0) target = $region25
  $region24: #{rpn_forward_net.1} parent=0 // pred_region
    _
  $region25: #{rpn_forward_net.1} parent=0 // pred_fallthru
    _
  // Predicated region
  $region26: #{rpn_forward_net.1} parent=0 // pred_check
    _
  $region27: #{rpn_forward_net.1} parent=0 // pred_check_branch
    %2573 = sbr.rel (0) target = $region29
  $region28: #{rpn_forward_net.1} parent=0 // pred_region
    _
  $region29: #{rpn_forward_net.1} parent=0 // pred_fallthru
    _

</llo_original>
